<compile_context>
chip_gen: v7x
topology: tpu7x:2x2x1
jax: 0.10.0
libtpu: 0.0.40
codegen_flags: <defaults>
</compile_context>

<pallas_src>
import functools

import jax
import jax.numpy as jnp
from jax.experimental import pallas as pl
from jax.experimental.pallas import tpu as pltpu


# ----------------------------- Pallas kernel --------------------------------
def _critic_mlp_kernel(x_ref, w1_ref, b1_ref, w2_ref, b2_ref, w3_ref, b3_ref,
                       o_ref):
    """Fused 3-layer MLP for one batch tile of tm rows.

    x_ref: (tm, d_in) bf16, weights bf16, biases f32, output (tm, 1) f32.
    """
    f32 = jnp.float32
    bf16 = jnp.bfloat16

    # ---- Layer 1: single K=22 matmul (concat already done in the wrapper).
    h1 = jnp.dot(x_ref[...], w1_ref[...], preferred_element_type=f32)
    h1 = jnp.maximum(h1 + b1_ref[...], 0.0)                      # (tm, 400) f32

    # ---- Layer 2
    h2 = jnp.dot(h1.astype(bf16), w2_ref[...], preferred_element_type=f32)
    h2 = jnp.maximum(h2 + b2_ref[...], 0.0)                      # (tm, 300) f32

    # ---- Layer 3: plain orientation, (tm, 300) @ (300, 1) -> (tm, 1).
    q = jnp.dot(h2.astype(bf16), w3_ref[...], preferred_element_type=f32)
    o_ref[...] = (q + b3_ref[...]).astype(o_ref.dtype)


# --------------------------- parameter preparation ---------------------------
def prepare_critic_params(params):
    """One-time casts / reshapes so the hot path does no weight conversion.

    Input params are (w1, b1, w2, b2, w3, b3) with weights stored as (in, out)
    and biases as (out,) or (1, out).  Returns bf16 weights and f32 (1, out)
    biases ready to feed to critic_forward.
    """
    w1, b1, w2, b2, w3, b3 = params
    bf16, f32 = jnp.bfloat16, jnp.float32
    return (
        w1.astype(bf16), jnp.reshape(b1, (1, -1)).astype(f32),
        w2.astype(bf16), jnp.reshape(b2, (1, -1)).astype(f32),
        w3.astype(bf16), jnp.reshape(b3, (1, -1)).astype(f32),
    )


# ------------------------------ entry point ----------------------------------
@functools.partial(jax.jit, static_argnames=("tm",))
def critic_forward(observation_dict, action, prepared_params, *, tm=None):
    """Mirrors Critic.forward(observation_dict, action) -> (B, 1)."""
    obs = observation_dict["observation"]
    ag = observation_dict["achieved_goal"]
    dg = observation_dict["desired_goal"]
    act = action
    B = obs.shape[0]

    w1, b1, w2, b2, w3, b3 = prepared_params
    d_in = w1.shape[0]

    # Adaptive batch tile: big enough to amortize the ~0.35 us/step overhead,
    # small enough that B >= 256 yields >= 2 grid steps (v7x megacore).
    if tm is None:
        tm = 512 if B >= 1024 else (256 if B >= 512 else 128)
    assert tm % 8 == 0 and tm > 0, (
        f"tm must be a positive multiple of 8 (sublane size), got {tm}")

    # Fused concat (PyTorch torch.cat) + bf16 cast in the wrapper.
    x = jnp.concatenate([obs, ag, dg, act], axis=-1).astype(jnp.bfloat16)
    assert x.shape[1] == d_in, (x.shape, d_in)

    # Pad batch to a multiple of the tile so the grid is clean.  Padded rows
    # compute bias-only garbage that is sliced away below.
    B_pad = pl.cdiv(B, tm) * tm
    if B_pad != B:
        x = jnp.pad(x, ((0, B_pad - B), (0, 0)))

    # Grid-invariant index_map: weights are DMA'd once and stay VMEM-resident.
    w_spec = lambda a: pl.BlockSpec(a.shape, lambda i: (0, 0))

    out = pl.pallas_call(
        _critic_mlp_kernel,
        out_shape=jax.ShapeDtypeStruct((B_pad, 1), jnp.float32),
        grid=(B_pad // tm,),
        in_specs=[
            pl.BlockSpec((tm, d_in), lambda i: (i, 0)),
            w_spec(w1), w_spec(b1),
            w_spec(w2), w_spec(b2),
            w_spec(w3), w_spec(b3),
        ],
        out_specs=pl.BlockSpec((tm, 1), lambda i: (i, 0)),
        compiler_params=pltpu.CompilerParams(
            dimension_semantics=("parallel",)),   # batch tiles across TCs
    )(x, w1, b1, w2, b2, w3, b3)

    return out[:B]


# ------------------------- deterministic param init -------------------------
def init_critic_params(key, input_dim, hidden_layers=(400, 300), out_dim=1):
    """PyTorch-style Linear init: U(-1/sqrt(fan_in), 1/sqrt(fan_in)).

    Weights are stored transposed, i.e. (in, out); biases as (1, out).
    """
    dims = [input_dim, *hidden_layers, out_dim]
    params = []
    for fan_in, fan_out in zip(dims[:-1], dims[1:]):
        key, kw, kb = jax.random.split(key, 3)
        bound = 1.0 / jnp.sqrt(float(fan_in))
        w = jax.random.uniform(kw, (fan_in, fan_out), jnp.float32,
                               minval=-bound, maxval=bound)
        b = jax.random.uniform(kb, (1, fan_out), jnp.float32,
                               minval=-bound, maxval=bound)
        params.extend([w, b])
    return tuple(params)


# --------------------------------- driver ------------------------------------
if __name__ == "__main__":
    # Env-like shapes: obs=12, achieved_goal=3, desired_goal=3, action=4 -> 22.
    OBS, AG, DG, ACT = 12, 3, 3, 4
    input_dim = OBS + AG + DG + ACT

    key = jax.random.PRNGKey(0)
    key, k_params = jax.random.split(key)
    raw_params = init_critic_params(k_params, input_dim,
                                    hidden_layers=(400, 300), out_dim=1)
    params = prepare_critic_params(raw_params)   # one-time bf16 casts

    def make_batch(b, k):
        ko, ka, kd, kc = jax.random.split(k, 4)
        obs_dict = {
            "observation":   jax.random.normal(ko, (b, OBS), jnp.float32),
            "achieved_goal": jax.random.normal(ka, (b, AG),  jnp.float32),
            "desired_goal":  jax.random.normal(kd, (b, DG),  jnp.float32),
        }
        action = jax.random.normal(kc, (b, ACT), jnp.float32)
        return obs_dict, action

    def reference(obs_dict, action, ps):
        # Same math as the kernel (bf16 operands, f32 accumulation).
        w1, b1, w2, b2, w3, b3 = ps
        bf = lambda a: a.astype(jnp.bfloat16)
        x = jnp.concatenate([obs_dict["observation"], obs_dict["achieved_goal"],
                             obs_dict["desired_goal"], action], axis=-1)
        h1 = jnp.maximum(jnp.dot(bf(x), bf(w1),
                                 preferred_element_type=jnp.float32) + b1, 0.0)
        h2 = jnp.maximum(jnp.dot(bf(h1), bf(w2),
                                 preferred_element_type=jnp.float32) + b2, 0.0)
        return jnp.dot(bf(h2), bf(w3),
                       preferred_element_type=jnp.float32) + b3

    # Small batch (B=2, single tile) and a multi-tile batch to exercise the
    # grid / resident-weight path.
    for b in (2, 512):
        key, kb = jax.random.split(key)
        obs_dict, action = make_batch(b, kb)
        q = jax.block_until_ready(critic_forward(obs_dict, action, params))
        ref = reference(obs_dict, action, raw_params)
        assert q.shape == (b, 1), q.shape
        assert jnp.allclose(q, ref, atol=1e-2, rtol=1e-2), \
            float(jnp.max(jnp.abs(q - ref)))

    print("KERNEL_OK")
</pallas_src>

<mosaic_0001>
module attributes {stable_mosaic.version = 11 : i64} {
  func.func @_critic_mlp_kernel(%arg0: i32, %arg1: memref<128x22xbf16, #tpu.memory_space<vmem>>, %arg2: memref<22x400xbf16, #tpu.memory_space<vmem>>, %arg3: memref<1x400xf32, #tpu.memory_space<vmem>>, %arg4: memref<400x300xbf16, #tpu.memory_space<vmem>>, %arg5: memref<1x300xf32, #tpu.memory_space<vmem>>, %arg6: memref<300x1xbf16, #tpu.memory_space<vmem>>, %arg7: memref<1x1xf32, #tpu.memory_space<vmem>>, %arg8: memref<128x1xf32, #tpu.memory_space<vmem>>) attributes {dimension_semantics = [#tpu.dimension_semantics<parallel>], iteration_bounds = array<i64: 1>, scalar_prefetch = 0 : i64, scratch_operands = 0 : i64, tpu.core_type = #tpu.core_type<tc>, window_params = [{transform_indices = @transform_0, window_bounds = array<i64: 128, 22>}, {pipeline_mode = #tpu.pipeline_mode<synchronous>, transform_indices = @transform_1, window_bounds = array<i64: 22, 400>}, {pipeline_mode = #tpu.pipeline_mode<synchronous>, transform_indices = @transform_2, window_bounds = array<i64: 1, 400>}, {pipeline_mode = #tpu.pipeline_mode<synchronous>, transform_indices = @transform_3, window_bounds = array<i64: 400, 300>}, {pipeline_mode = #tpu.pipeline_mode<synchronous>, transform_indices = @transform_4, window_bounds = array<i64: 1, 300>}, {pipeline_mode = #tpu.pipeline_mode<synchronous>, transform_indices = @transform_5, window_bounds = array<i64: 300, 1>}, {pipeline_mode = #tpu.pipeline_mode<synchronous>, transform_indices = @transform_6, window_bounds = array<i64: 1, 1>}, {transform_indices = @transform_7, window_bounds = array<i64: 128, 1>}]} {
    %c0 = arith.constant 0 : index
    %c0_0 = arith.constant 0 : index
    %0 = vector.load %arg1[%c0, %c0_0] : memref<128x22xbf16, #tpu.memory_space<vmem>>, vector<128x22xbf16>
    %c0_1 = arith.constant 0 : index
    %c0_2 = arith.constant 0 : index
    %1 = vector.load %arg2[%c0_1, %c0_2] : memref<22x400xbf16, #tpu.memory_space<vmem>>, vector<22x400xbf16>
    %cst = arith.constant dense<0.000000e+00> : vector<128x400xf32>
    %2 = tpu.matmul %0, %1, %cst {dimension_numbers = #tpu.dot_dimension_numbers<[1], [0], [0], [1], [0, 0, 1, 1], [], []>} : vector<128x22xbf16>, vector<22x400xbf16>, vector<128x400xf32> -> vector<128x400xf32>
    %c0_3 = arith.constant 0 : index
    %c0_4 = arith.constant 0 : index
    %3 = vector.load %arg3[%c0_3, %c0_4] : memref<1x400xf32, #tpu.memory_space<vmem>>, vector<1x400xf32>
    %4 = vector.broadcast %3 : vector<1x400xf32> to vector<128x400xf32>
    %5 = arith.addf %2, %4 : vector<128x400xf32>
    %cst_5 = arith.constant 0.000000e+00 : f32
    %6 = vector.broadcast %cst_5 : f32 to vector<128x400xf32>
    %7 = arith.maximumf %5, %6 : vector<128x400xf32>
    %8 = arith.truncf %7 : vector<128x400xf32> to vector<128x400xbf16>
    %c0_6 = arith.constant 0 : index
    %c0_7 = arith.constant 0 : index
    %9 = vector.load %arg4[%c0_6, %c0_7] : memref<400x300xbf16, #tpu.memory_space<vmem>>, vector<400x300xbf16>
    %cst_8 = arith.constant dense<0.000000e+00> : vector<128x300xf32>
    %10 = tpu.matmul %8, %9, %cst_8 {dimension_numbers = #tpu.dot_dimension_numbers<[1], [0], [0], [1], [0, 0, 1, 1], [], []>} : vector<128x400xbf16>, vector<400x300xbf16>, vector<128x300xf32> -> vector<128x300xf32>
    %c0_9 = arith.constant 0 : index
    %c0_10 = arith.constant 0 : index
    %11 = vector.load %arg5[%c0_9, %c0_10] : memref<1x300xf32, #tpu.memory_space<vmem>>, vector<1x300xf32>
    %12 = vector.broadcast %11 : vector<1x300xf32> to vector<128x300xf32>
    %13 = arith.addf %10, %12 : vector<128x300xf32>
    %cst_11 = arith.constant 0.000000e+00 : f32
    %14 = vector.broadcast %cst_11 : f32 to vector<128x300xf32>
    %15 = arith.maximumf %13, %14 : vector<128x300xf32>
    %16 = arith.truncf %15 : vector<128x300xf32> to vector<128x300xbf16>
    %c0_12 = arith.constant 0 : index
    %c0_13 = arith.constant 0 : index
    %17 = vector.load %arg6[%c0_12, %c0_13] : memref<300x1xbf16, #tpu.memory_space<vmem>>, vector<300x1xbf16>
    %cst_14 = arith.constant dense<0.000000e+00> : vector<128x1xf32>
    %18 = tpu.matmul %16, %17, %cst_14 {dimension_numbers = #tpu.dot_dimension_numbers<[1], [0], [0], [1], [0, 0, 1, 1], [], []>} : vector<128x300xbf16>, vector<300x1xbf16>, vector<128x1xf32> -> vector<128x1xf32>
    %c0_15 = arith.constant 0 : index
    %c0_16 = arith.constant 0 : index
    %19 = vector.load %arg7[%c0_15, %c0_16] : memref<1x1xf32, #tpu.memory_space<vmem>>, vector<1x1xf32>
    %20 = vector.broadcast %19 : vector<1x1xf32> to vector<128x1xf32>
    %21 = arith.addf %18, %20 : vector<128x1xf32>
    %c0_17 = arith.constant 0 : index
    %c0_18 = arith.constant 0 : index
    %22 = vector.load %arg8[%c0_17, %c0_18] : memref<128x1xf32, #tpu.memory_space<vmem>>, vector<128x1xf32>
    tpu.vector_store %arg8[%c0_17, %c0_18], %21 {strides = array<i32>} : memref<128x1xf32, #tpu.memory_space<vmem>>, vector<128x1xf32>,
    return
  }
  func.func @transform_0(%arg0: i32) -> (i32, i32) {
    %c0_i32 = arith.constant 0 : i32
    %c0_i32_0 = arith.constant 0 : i32
    return %arg0, %c0_i32 : i32, i32
  }
  func.func @transform_1(%arg0: i32) -> (i32, i32) {
    %c0_i32 = arith.constant 0 : i32
    %c0_i32_0 = arith.constant 0 : i32
    %c0_i32_1 = arith.constant 0 : i32
    return %c0_i32, %c0_i32_0 : i32, i32
  }
  func.func @transform_2(%arg0: i32) -> (i32, i32) {
    %c0_i32 = arith.constant 0 : i32
    %c0_i32_0 = arith.constant 0 : i32
    %c0_i32_1 = arith.constant 0 : i32
    return %c0_i32, %c0_i32_0 : i32, i32
  }
  func.func @transform_3(%arg0: i32) -> (i32, i32) {
    %c0_i32 = arith.constant 0 : i32
    %c0_i32_0 = arith.constant 0 : i32
    %c0_i32_1 = arith.constant 0 : i32
    return %c0_i32, %c0_i32_0 : i32, i32
  }
  func.func @transform_4(%arg0: i32) -> (i32, i32) {
    %c0_i32 = arith.constant 0 : i32
    %c0_i32_0 = arith.constant 0 : i32
    %c0_i32_1 = arith.constant 0 : i32
    return %c0_i32, %c0_i32_0 : i32, i32
  }
  func.func @transform_5(%arg0: i32) -> (i32, i32) {
    %c0_i32 = arith.constant 0 : i32
    %c0_i32_0 = arith.constant 0 : i32
    %c0_i32_1 = arith.constant 0 : i32
    return %c0_i32, %c0_i32_0 : i32, i32
  }
  func.func @transform_6(%arg0: i32) -> (i32, i32) {
    %c0_i32 = arith.constant 0 : i32
    %c0_i32_0 = arith.constant 0 : i32
    %c0_i32_1 = arith.constant 0 : i32
    return %c0_i32, %c0_i32_0 : i32, i32
  }
  func.func @transform_7(%arg0: i32) -> (i32, i32) {
    %c0_i32 = arith.constant 0 : i32
    %c0_i32_0 = arith.constant 0 : i32
    return %arg0, %c0_i32 : i32, i32
  }
}

</mosaic_0001>

<llo_original>
// kernel: critic_forward.1
$region0: #{critic_forward.1}
  #allocation0 [shape = 'u32[]', space=smem, size = 0x4, offset = 0x4, fixed_abs, tag = 'smem constant byte address 0x4 - core index']
  #allocation1 [shape = 'u32[144,128]{1,0:T(1,128)}', space=vmem, size = 0x12000, scoped, tag = 'internal scratch']
  #allocation2 [shape = 'f32[1,1]{1,0:T(1,128)S(1)}', space=vmem, size = 0x200, scoped, tag = 'scoped memory for critic_forward.1']
  %s0 = inlined_call_operand.vmem [shape: bf16[128,22], index: 0, kind: input, shape index: {}]
  %s1 = inlined_call_operand.vmem [shape: bf16[22,400], index: 1, kind: input, shape index: {}]
  %s2 = inlined_call_operand.vmem [shape: f32[1,400], index: 2, kind: input, shape index: {}]
  %s3 = inlined_call_operand.hbm [shape: bf16[400,300], index: 3, kind: input, shape index: {}]
  %s4 = inlined_call_operand.vmem [shape: f32[1,300], index: 4, kind: input, shape index: {}]
  %s5 = inlined_call_operand.vmem [shape: bf16[300,1], index: 5, kind: input, shape index: {}]
  %s6 = inlined_call_operand.<no memory space> [shape: f32[1,1], index: 6, kind: input, shape index: {}]
  %s7 = inlined_call_operand.vmem [shape: f32[128,1], index: 7, kind: output, shape index: {}]
  %s8 = sld [smem:[#allocation0]]
  $region42: #{critic_forward.1} parent=0
    _
  %s10 = ssub.s32 1, %s8
  %s11 = scalar_select 0, %s10, %s8
  %v12 = vstv %s6
  %13 = vst [vmem:[#allocation2] sm:$0x1] %v12
  $region1: #{critic_forward.1} parent=0
    #allocation3 [shape = 'u8[307200]{0}', space=vmem, size = 0x4b000, scoped, tag = 'input window, operand 3, single buffered']
    #allocation4 [shape = 's32[1]{0}', space=sflag, size = 0x4, scoped, tag = 'scoped memory for critic_forward.1']
    %14 = vsyncpa [#allocation4], 0
    // Predicated region
    $region2: #{critic_forward.1} parent=1 // pred_check
      _
    $region3: #{critic_forward.1} parent=1 // pred_check_branch
      %16 = sbr.rel (0) target = $region5
    $region4: #{critic_forward.1} parent=1 // pred_region
      _
    $region5: #{critic_forward.1} parent=1 // pred_fallthru
      _
    // Predicated region
    $region6: #{critic_forward.1} parent=1 // pred_check
      _
    $region7: #{critic_forward.1} parent=1 // pred_check_branch
      %18 = sbr.rel (0) target = $region9
    $region8: #{critic_forward.1} parent=1 // pred_region
      _
    $region9: #{critic_forward.1} parent=1 // pred_fallthru
      _
    // Predicated region
    $region10: #{critic_forward.1} parent=1 // pred_check
      _
    $region11: #{critic_forward.1} parent=1 // pred_check_branch
      %20 = sbr.rel (0) target = $region13
    $region12: #{critic_forward.1} parent=1 // pred_region
      _
    $region13: #{critic_forward.1} parent=1 // pred_fallthru
      _
    // Predicated region
    $region14: #{critic_forward.1} parent=1 // pred_check
      _
    $region15: #{critic_forward.1} parent=1 // pred_check_branch
      %22 = sbr.rel (0) target = $region17
    $region16: #{critic_forward.1} parent=1 // pred_region
      %s24 = ssub.s32 9600, 9600
      %25 = vsyncadd [#allocation4], %s24
      %s26 = sshll.u32 [#allocation3], 4
      %s27 = int_to_ptr.vmem [resolvable:$true] %s26
      %32 = dma.hbm_to_vmem [thread:$0]  %s3, 9600, %s27, [#allocation4], 192, 192, 12
    $region17: #{critic_forward.1} parent=1 // pred_fallthru
      _
    // Predicated region
    $region18: #{critic_forward.1} parent=1 // pred_check
      _
    $region19: #{critic_forward.1} parent=1 // pred_check_branch
      %34 = sbr.rel (0) target = $region21
    $region20: #{critic_forward.1} parent=1 // pred_region
      _
    $region21: #{critic_forward.1} parent=1 // pred_fallthru
      _
    // Predicated region
    $region22: #{critic_forward.1} parent=1 // pred_check
      _
    $region23: #{critic_forward.1} parent=1 // pred_check_branch
      %36 = sbr.rel (0) target = $region25
    $region24: #{critic_forward.1} parent=1 // pred_region
      _
    $region25: #{critic_forward.1} parent=1 // pred_fallthru
      _
    // Predicated region
    $region26: #{critic_forward.1} parent=1 // pred_check
      _
    $region27: #{critic_forward.1} parent=1 // pred_check_branch
      %38 = sbr.rel (0) target = $region29
    $region28: #{critic_forward.1} parent=1 // pred_region
      _
    $region29: #{critic_forward.1} parent=1 // pred_fallthru
      _
    // Predicated region
    $region30: #{critic_forward.1} parent=1 // pred_check
      _
    $region31: #{critic_forward.1} parent=1 // pred_check_branch
      %40 = sbr.rel (0) target = $region33
    $region32: #{critic_forward.1} parent=1 // pred_region
      %41 = dma.done [#allocation4], 9600
    $region33: #{critic_forward.1} parent=1 // pred_fallthru
      _
    %v43 = vld [vmem:[%s0] sm:$0xf]
    %v44 = vld [vmem:[%s0 + $0x4] sm:$0xf]
    %v45 = vld [vmem:[%s0 + $0x8] sm:$0xf]
    %v46 = vld [vmem:[%s0 + $0xc] sm:$0xf]
    %v47 = vld [vmem:[%s0 + $0x10] sm:$0xf]
    %v48 = vld [vmem:[%s0 + $0x14] sm:$0xf]
    %v49 = vld [vmem:[%s0 + $0x18] sm:$0xf]
    %v50 = vld [vmem:[%s0 + $0x1c] sm:$0xf]
    %v51 = vld [vmem:[%s0 + $0x20] sm:$0xf]
    %v52 = vld [vmem:[%s0 + $0x24] sm:$0xf]
    %v53 = vld [vmem:[%s0 + $0x28] sm:$0xf]
    %v54 = vld [vmem:[%s0 + $0x2c] sm:$0xf]
    %v55 = vld [vmem:[%s0 + $0x30] sm:$0xf]
    %v56 = vld [vmem:[%s0 + $0x34] sm:$0xf]
    %v57 = vld [vmem:[%s0 + $0x38] sm:$0xf]
    %v58 = vld [vmem:[%s0 + $0x3c] sm:$0xf]
    %v59 = vld [vmem:[%s1] sm:$0xff]
    %v60 = vld [vmem:[%s1 + $0x8] sm:$0xff]
    %v61 = vld [vmem:[%s1 + $0x10] sm:$0xff]
    %v62 = vld [vmem:[%s1 + $0x18] sm:$0xff]
    %v63 = vld [vmem:[%s1 + $0x20] sm:$0x77]
    %v64 = vld [vmem:[%s1 + $0x28] sm:$0x77]
    %v65 = vld [vmem:[%s2] sm:$0xf]
    %v67 = vlaneseq
    %v68 = vshrl.u32 %v67, 7
    %v69 = vsub.s32 0, %v68
    %v70 = vrot.slane %v65, %v69
    %v71 = vlaneseq
    %v72 = vshrl.u32 %v71, 7
    %v73 = vsub.s32 1, %v72
    %v74 = vrot.slane %v65, %v73
    %v75 = vlaneseq
    %v76 = vshrl.u32 %v75, 7
    %v77 = vsub.s32 2, %v76
    %v78 = vrot.slane %v65, %v77
    %v79 = vlaneseq
    %v80 = vshrl.u32 %v79, 7
    %v81 = vsub.s32 3, %v80
    %v82 = vrot.slane %v65, %v81
    %v103 = vunpack.c.l.b16 %v43
    %v104 = vunpack.c.l.b16 %v44
    %v105 = vunpack.c.l.b16 %v45
    %v106 = vunpack.c.l.b16 %v46
    %v107 = vunpack.c.l.b16 %v47
    %v108 = vunpack.c.l.b16 %v48
    %v109 = vunpack.c.l.b16 %v49
    %v110 = vunpack.c.l.b16 %v50
    %v111 = vunpack.c.l.b16 %v51
    %v112 = vunpack.c.l.b16 %v52
    %v113 = vunpack.c.l.b16 %v53
    %v114 = vunpack.c.l.b16 %v54
    %v115 = vunpack.c.l.b16 %v55
    %v116 = vunpack.c.l.b16 %v56
    %v117 = vunpack.c.l.b16 %v57
    %v118 = vunpack.c.l.b16 %v58
    %v119 = vpack.c.b16 %v104, %v103
    %v120 = vpack.c.b16 %v106, %v105
    %v121 = vpack.c.b16 %v108, %v107
    %v122 = vpack.c.b16 %v110, %v109
    %v123 = vpack.c.b16 %v112, %v111
    %v124 = vpack.c.b16 %v114, %v113
    %v125 = vpack.c.b16 %v116, %v115
    %v126 = vpack.c.b16 %v118, %v117
    %v133 = vunpack.c.l.b16 %v59
    %v134 = vunpack.c.h.b16 %v59
    %v135 = vunpack.c.l.b16 %v60
    %v136 = vunpack.c.h.b16 %v60
    %v137 = vunpack.c.l.b16 %v61
    %v138 = vunpack.c.h.b16 %v61
    %v139 = vunpack.c.l.b16 %v62
    %v140 = vunpack.c.h.b16 %v62
    %v141 = vunpack.c.l.b16 %v63
    %v142 = vunpack.c.h.b16 %v63
    %v143 = vunpack.c.l.b16 %v64
    %v144 = vunpack.c.h.b16 %v64
    %v145 = vpack.c.b16 %v137, %v133
    %v146 = vpack.c.b16 %v138, %v134
    %v147 = vpack.c.b16 %v139, %v135
    %v148 = vpack.c.b16 %v140, %v136
    %v149 = vpack.c.b16 %v141, %v141
    %v150 = vpack.c.b16 %v142, %v142
    %v151 = vpack.c.b16 %v143, %v143
    %v152 = vpack.c.b16 %v144, %v144
    %vm157 = vcmask 179200
    %v159 = vsel %vm157, %v119, 0
    %v162 = vsel %vm157, %v120, 0
    %v165 = vsel %vm157, %v121, 0
    %v168 = vsel %vm157, %v122, 0
    %v171 = vsel %vm157, %v123, 0
    %v174 = vsel %vm157, %v124, 0
    %v177 = vsel %vm157, %v125, 0
    %v180 = vsel %vm157, %v126, 0
    %vm182 = vcmask 1042432
    %v184 = vsel %vm182, %v149, 0
    %v187 = vsel %vm182, %v150, 0
    %v190 = vsel %vm182, %v151, 0
    %v193 = vsel %vm182, %v152, 0
    %195 = vmatprep.subr.bf16.mxu0 %v146
    %196 = vmatpush1.bf16.msra.mxu0 %v145
    %197 = vmatprep.subr.bf16.mxu0 %v187
    %198 = vmatpush1.bf16.msra.mxu0 %v184
    %199 = vmatprep.subr.bf16.mxu0 0
    %200 = vmatpush1.bf16.msra.mxu0 0
    %201 = vmatprep.subr.bf16.mxu0 0
    %202 = vmatpush1.bf16.msra.mxu0 0
    %203 = vmatprep.subr.bf16.mxu0 0
    %204 = vmatpush1.bf16.msra.mxu0 0
    %205 = vmatprep.subr.bf16.mxu0 0
    %206 = vmatpush1.bf16.msra.mxu0 0
    %207 = vmatprep.subr.bf16.mxu0 0
    %208 = vmatpush1.bf16.msra.mxu0 0
    %209 = vmatprep.subr.bf16.mxu0 0
    %210 = vmatpush1.bf16.msra.mxu0 0
    %211 = vmatprep.subr.bf16.mxu0 0
    %212 = vmatpush1.bf16.msra.mxu0 0
    %213 = vmatprep.subr.bf16.mxu0 0
    %214 = vmatpush1.bf16.msra.mxu0 0
    %215 = vmatprep.subr.bf16.mxu0 0
    %216 = vmatpush1.bf16.msra.mxu0 0
    %217 = vmatprep.subr.bf16.mxu0 0
    %218 = vmatpush1.bf16.msra.mxu0 0
    %219 = vmatprep.subr.bf16.mxu0 0
    %220 = vmatpush1.bf16.msra.mxu0 0
    %221 = vmatprep.subr.bf16.mxu0 0
    %222 = vmatpush1.bf16.msra.mxu0 0
    %223 = vmatprep.subr.bf16.mxu0 0
    %224 = vmatpush1.bf16.msra.mxu0 0
    %225 = vmatprep.subr.bf16.mxu0 0
    %226 = vmatpush1.bf16.msra.mxu0 0
    %227 = vmatprep.mubr.bf16.mxu0 0
    %228 = vmatmul.mubr.bf16.gmra.mrb[0].mxu0 %v159
    %v229 = vpop.f32.mrb[0].mxu0
    %v230 = vadd.f32 %v70, %v229
    %v231 = vpop.f32.mrb[0].mxu0
    %v232 = vadd.f32 %v74, %v231
    %v233 = vpop.f32.mrb[0].mxu0
    %v234 = vadd.f32 %v70, %v233
    %v235 = vpop.f32.mrb[0].mxu0
    %v236 = vadd.f32 %v74, %v235
    %237 = vmatprep.mubr.bf16.mxu0 0
    %238 = vmatmul.mubr.bf16.gmra.mrb[0].mxu0 %v162
    %v239 = vpop.f32.mrb[0].mxu0
    %v240 = vadd.f32 %v70, %v239
    %v241 = vpop.f32.mrb[0].mxu0
    %v242 = vadd.f32 %v74, %v241
    %v243 = vpop.f32.mrb[0].mxu0
    %v244 = vadd.f32 %v70, %v243
    %v245 = vpop.f32.mrb[0].mxu0
    %v246 = vadd.f32 %v74, %v245
    %247 = vmatprep.mubr.bf16.mxu0 0
    %248 = vmatmul.mubr.bf16.gmra.mrb[0].mxu0 %v165
    %v249 = vpop.f32.mrb[0].mxu0
    %v250 = vadd.f32 %v70, %v249
    %v251 = vpop.f32.mrb[0].mxu0
    %v252 = vadd.f32 %v74, %v251
    %v253 = vpop.f32.mrb[0].mxu0
    %v254 = vadd.f32 %v70, %v253
    %v255 = vpop.f32.mrb[0].mxu0
    %v256 = vadd.f32 %v74, %v255
    %257 = vmatprep.mubr.bf16.mxu0 0
    %258 = vmatmul.mubr.bf16.gmra.mrb[0].mxu0 %v168
    %v259 = vpop.f32.mrb[0].mxu0
    %v260 = vadd.f32 %v70, %v259
    %v261 = vpop.f32.mrb[0].mxu0
    %v262 = vadd.f32 %v74, %v261
    %v263 = vpop.f32.mrb[0].mxu0
    %v264 = vadd.f32 %v70, %v263
    %v265 = vpop.f32.mrb[0].mxu0
    %v266 = vadd.f32 %v74, %v265
    %267 = vmatprep.mubr.bf16.mxu0 0
    %268 = vmatmul.mubr.bf16.gmra.mrb[0].mxu0 %v171
    %v269 = vpop.f32.mrb[0].mxu0
    %v270 = vadd.f32 %v70, %v269
    %v271 = vpop.f32.mrb[0].mxu0
    %v272 = vadd.f32 %v74, %v271
    %v273 = vpop.f32.mrb[0].mxu0
    %v274 = vadd.f32 %v70, %v273
    %v275 = vpop.f32.mrb[0].mxu0
    %v276 = vadd.f32 %v74, %v275
    %277 = vmatprep.mubr.bf16.mxu0 0
    %278 = vmatmul.mubr.bf16.gmra.mrb[0].mxu0 %v174
    %v279 = vpop.f32.mrb[0].mxu0
    %v280 = vadd.f32 %v70, %v279
    %v281 = vpop.f32.mrb[0].mxu0
    %v282 = vadd.f32 %v74, %v281
    %v283 = vpop.f32.mrb[0].mxu0
    %v284 = vadd.f32 %v70, %v283
    %v285 = vpop.f32.mrb[0].mxu0
    %v286 = vadd.f32 %v74, %v285
    %287 = vmatprep.mubr.bf16.mxu0 0
    %288 = vmatmul.mubr.bf16.gmra.mrb[0].mxu0 %v177
    %v289 = vpop.f32.mrb[0].mxu0
    %v290 = vadd.f32 %v70, %v289
    %v291 = vpop.f32.mrb[0].mxu0
    %v292 = vadd.f32 %v74, %v291
    %v293 = vpop.f32.mrb[0].mxu0
    %v294 = vadd.f32 %v70, %v293
    %v295 = vpop.f32.mrb[0].mxu0
    %v296 = vadd.f32 %v74, %v295
    %297 = vmatprep.mubr.bf16.mxu0 0
    %298 = vmatmul.mubr.bf16.gmra.mrb[0].mxu0 %v180
    %v299 = vpop.f32.mrb[0].mxu0
    %v300 = vadd.f32 %v70, %v299
    %v301 = vpop.f32.mrb[0].mxu0
    %v302 = vadd.f32 %v74, %v301
    %v303 = vpop.f32.mrb[0].mxu0
    %v304 = vadd.f32 %v70, %v303
    %v305 = vpop.f32.mrb[0].mxu0
    %v306 = vadd.f32 %v74, %v305
    %307 = vdwg.mxu0
    %308 = vmatprep.subr.bf16.mxu0 %v148
    %309 = vmatpush1.bf16.msra.mxu0 %v147
    %310 = vmatprep.subr.bf16.mxu0 %v193
    %311 = vmatpush1.bf16.msra.mxu0 %v190
    %312 = vmatprep.subr.bf16.mxu0 0
    %313 = vmatpush1.bf16.msra.mxu0 0
    %314 = vmatprep.subr.bf16.mxu0 0
    %315 = vmatpush1.bf16.msra.mxu0 0
    %316 = vmatprep.subr.bf16.mxu0 0
    %317 = vmatpush1.bf16.msra.mxu0 0
    %318 = vmatprep.subr.bf16.mxu0 0
    %319 = vmatpush1.bf16.msra.mxu0 0
    %320 = vmatprep.subr.bf16.mxu0 0
    %321 = vmatpush1.bf16.msra.mxu0 0
    %322 = vmatprep.subr.bf16.mxu0 0
    %323 = vmatpush1.bf16.msra.mxu0 0
    %324 = vmatprep.subr.bf16.mxu0 0
    %325 = vmatpush1.bf16.msra.mxu0 0
    %326 = vmatprep.subr.bf16.mxu0 0
    %327 = vmatpush1.bf16.msra.mxu0 0
    %328 = vmatprep.subr.bf16.mxu0 0
    %329 = vmatpush1.bf16.msra.mxu0 0
    %330 = vmatprep.subr.bf16.mxu0 0
    %331 = vmatpush1.bf16.msra.mxu0 0
    %332 = vmatprep.subr.bf16.mxu0 0
    %333 = vmatpush1.bf16.msra.mxu0 0
    %334 = vmatprep.subr.bf16.mxu0 0
    %335 = vmatpush1.bf16.msra.mxu0 0
    %336 = vmatprep.subr.bf16.mxu0 0
    %337 = vmatpush1.bf16.msra.mxu0 0
    %338 = vmatprep.subr.bf16.mxu0 0
    %339 = vmatpush1.bf16.msra.mxu0 0
    %340 = vmatprep.mubr.bf16.mxu0 0
    %341 = vmatmul.mubr.bf16.gmra.mrb[0].mxu0 %v159
    %v342 = vpop.f32.mrb[0].mxu0
    %v343 = vadd.f32 %v78, %v342
    %v344 = vpop.f32.mrb[0].mxu0
    %v345 = vadd.f32 %v82, %v344
    %v346 = vpop.f32.mrb[0].mxu0
    %v347 = vadd.f32 %v78, %v346
    %v348 = vpop.f32.mrb[0].mxu0
    %v349 = vadd.f32 %v82, %v348
    %350 = vmatprep.mubr.bf16.mxu0 0
    %351 = vmatmul.mubr.bf16.gmra.mrb[0].mxu0 %v162
    %v352 = vpop.f32.mrb[0].mxu0
    %v353 = vadd.f32 %v78, %v352
    %v354 = vpop.f32.mrb[0].mxu0
    %v355 = vadd.f32 %v82, %v354
    %v356 = vpop.f32.mrb[0].mxu0
    %v357 = vadd.f32 %v78, %v356
    %v358 = vpop.f32.mrb[0].mxu0
    %v359 = vadd.f32 %v82, %v358
    %360 = vmatprep.mubr.bf16.mxu0 0
    %361 = vmatmul.mubr.bf16.gmra.mrb[0].mxu0 %v165
    %v362 = vpop.f32.mrb[0].mxu0
    %v363 = vadd.f32 %v78, %v362
    %v364 = vpop.f32.mrb[0].mxu0
    %v365 = vadd.f32 %v82, %v364
    %v366 = vpop.f32.mrb[0].mxu0
    %v367 = vadd.f32 %v78, %v366
    %v368 = vpop.f32.mrb[0].mxu0
    %v369 = vadd.f32 %v82, %v368
    %370 = vmatprep.mubr.bf16.mxu0 0
    %371 = vmatmul.mubr.bf16.gmra.mrb[0].mxu0 %v168
    %v372 = vpop.f32.mrb[0].mxu0
    %v373 = vadd.f32 %v78, %v372
    %v374 = vpop.f32.mrb[0].mxu0
    %v375 = vadd.f32 %v82, %v374
    %v376 = vpop.f32.mrb[0].mxu0
    %v377 = vadd.f32 %v78, %v376
    %v378 = vpop.f32.mrb[0].mxu0
    %v379 = vadd.f32 %v82, %v378
    %380 = vmatprep.mubr.bf16.mxu0 0
    %381 = vmatmul.mubr.bf16.gmra.mrb[0].mxu0 %v171
    %v382 = vpop.f32.mrb[0].mxu0
    %v383 = vadd.f32 %v78, %v382
    %v384 = vpop.f32.mrb[0].mxu0
    %v385 = vadd.f32 %v82, %v384
    %v386 = vpop.f32.mrb[0].mxu0
    %v387 = vadd.f32 %v78, %v386
    %v388 = vpop.f32.mrb[0].mxu0
    %v389 = vadd.f32 %v82, %v388
    %390 = vmatprep.mubr.bf16.mxu0 0
    %391 = vmatmul.mubr.bf16.gmra.mrb[0].mxu0 %v174
    %v392 = vpop.f32.mrb[0].mxu0
    %v393 = vadd.f32 %v78, %v392
    %v394 = vpop.f32.mrb[0].mxu0
    %v395 = vadd.f32 %v82, %v394
    %v396 = vpop.f32.mrb[0].mxu0
    %v397 = vadd.f32 %v78, %v396
    %v398 = vpop.f32.mrb[0].mxu0
    %v399 = vadd.f32 %v82, %v398
    %400 = vmatprep.mubr.bf16.mxu0 0
    %401 = vmatmul.mubr.bf16.gmra.mrb[0].mxu0 %v177
    %v402 = vpop.f32.mrb[0].mxu0
    %v403 = vadd.f32 %v78, %v402
    %v404 = vpop.f32.mrb[0].mxu0
    %v405 = vadd.f32 %v82, %v404
    %v406 = vpop.f32.mrb[0].mxu0
    %v407 = vadd.f32 %v78, %v406
    %v408 = vpop.f32.mrb[0].mxu0
    %v409 = vadd.f32 %v82, %v408
    %410 = vmatprep.mubr.bf16.mxu0 0
    %411 = vmatmul.mubr.bf16.gmra.mrb[0].mxu0 %v180
    %v412 = vpop.f32.mrb[0].mxu0
    %v413 = vadd.f32 %v78, %v412
    %v414 = vpop.f32.mrb[0].mxu0
    %v415 = vadd.f32 %v82, %v414
    %v416 = vpop.f32.mrb[0].mxu0
    %v417 = vadd.f32 %v78, %v416
    %v418 = vpop.f32.mrb[0].mxu0
    %v419 = vadd.f32 %v82, %v418
    %420 = vdwg.mxu0
    %v421 = vmax.f32 %v230, 0.0
    %v422 = vmax.f32 %v232, 0.0
    %v423 = vmax.f32 %v343, 0.0
    %v424 = vmax.f32 %v345, 0.0
    %v425 = vmax.f32 %v234, 0.0
    %v426 = vmax.f32 %v236, 0.0
    %v427 = vmax.f32 %v347, 0.0
    %v428 = vmax.f32 %v349, 0.0
    %v429 = vmax.f32 %v240, 0.0
    %v430 = vmax.f32 %v242, 0.0
    %v431 = vmax.f32 %v353, 0.0
    %v432 = vmax.f32 %v355, 0.0
    %v433 = vmax.f32 %v244, 0.0
    %v434 = vmax.f32 %v246, 0.0
    %v435 = vmax.f32 %v357, 0.0
    %v436 = vmax.f32 %v359, 0.0
    %v437 = vmax.f32 %v250, 0.0
    %v438 = vmax.f32 %v252, 0.0
    %v439 = vmax.f32 %v363, 0.0
    %v440 = vmax.f32 %v365, 0.0
    %v441 = vmax.f32 %v254, 0.0
    %v442 = vmax.f32 %v256, 0.0
    %v443 = vmax.f32 %v367, 0.0
    %v444 = vmax.f32 %v369, 0.0
    %v445 = vmax.f32 %v260, 0.0
    %v446 = vmax.f32 %v262, 0.0
    %v447 = vmax.f32 %v373, 0.0
    %v448 = vmax.f32 %v375, 0.0
    %v449 = vmax.f32 %v264, 0.0
    %v450 = vmax.f32 %v266, 0.0
    %v451 = vmax.f32 %v377, 0.0
    %v452 = vmax.f32 %v379, 0.0
    %v453 = vmax.f32 %v270, 0.0
    %v454 = vmax.f32 %v272, 0.0
    %v455 = vmax.f32 %v383, 0.0
    %v456 = vmax.f32 %v385, 0.0
    %v457 = vmax.f32 %v274, 0.0
    %v458 = vmax.f32 %v276, 0.0
    %v459 = vmax.f32 %v387, 0.0
    %v460 = vmax.f32 %v389, 0.0
    %v461 = vmax.f32 %v280, 0.0
    %v462 = vmax.f32 %v282, 0.0
    %v463 = vmax.f32 %v393, 0.0
    %v464 = vmax.f32 %v395, 0.0
    %v465 = vmax.f32 %v284, 0.0
    %v466 = vmax.f32 %v286, 0.0
    %v467 = vmax.f32 %v397, 0.0
    %v468 = vmax.f32 %v399, 0.0
    %v469 = vmax.f32 %v290, 0.0
    %v470 = vmax.f32 %v292, 0.0
    %v471 = vmax.f32 %v403, 0.0
    %v472 = vmax.f32 %v405, 0.0
    %v473 = vmax.f32 %v294, 0.0
    %v474 = vmax.f32 %v296, 0.0
    %v475 = vmax.f32 %v407, 0.0
    %v476 = vmax.f32 %v409, 0.0
    %v477 = vmax.f32 %v300, 0.0
    %v478 = vmax.f32 %v302, 0.0
    %v479 = vmax.f32 %v413, 0.0
    %v480 = vmax.f32 %v415, 0.0
    %v481 = vmax.f32 %v304, 0.0
    %v482 = vmax.f32 %v306, 0.0
    %v483 = vmax.f32 %v417, 0.0
    %v484 = vmax.f32 %v419, 0.0
    %v485 = vpack.c.bf16 %v425, %v421
    %v486 = vpack.c.bf16 %v426, %v422
    %v487 = vpack.c.bf16 %v427, %v423
    %v488 = vpack.c.bf16 %v428, %v424
    %v489 = vpack.c.bf16 %v433, %v429
    %v490 = vpack.c.bf16 %v434, %v430
    %v491 = vpack.c.bf16 %v435, %v431
    %v492 = vpack.c.bf16 %v436, %v432
    %v493 = vpack.c.bf16 %v441, %v437
    %v494 = vpack.c.bf16 %v442, %v438
    %v495 = vpack.c.bf16 %v443, %v439
    %v496 = vpack.c.bf16 %v444, %v440
    %v497 = vpack.c.bf16 %v449, %v445
    %v498 = vpack.c.bf16 %v450, %v446
    %v499 = vpack.c.bf16 %v451, %v447
    %v500 = vpack.c.bf16 %v452, %v448
    %v501 = vpack.c.bf16 %v457, %v453
    %v502 = vpack.c.bf16 %v458, %v454
    %v503 = vpack.c.bf16 %v459, %v455
    %v504 = vpack.c.bf16 %v460, %v456
    %v505 = vpack.c.bf16 %v465, %v461
    %v506 = vpack.c.bf16 %v466, %v462
    %v507 = vpack.c.bf16 %v467, %v463
    %v508 = vpack.c.bf16 %v468, %v464
    %v509 = vpack.c.bf16 %v473, %v469
    %v510 = vpack.c.bf16 %v474, %v470
    %v511 = vpack.c.bf16 %v475, %v471
    %v512 = vpack.c.bf16 %v476, %v472
    %v513 = vpack.c.bf16 %v481, %v477
    %v514 = vpack.c.bf16 %v482, %v478
    %v515 = vpack.c.bf16 %v483, %v479
    %v516 = vpack.c.bf16 %v484, %v480
    %v517 = vld [vmem:[#allocation3] sm:$0xff]
    %v518 = vld [vmem:[#allocation3 + $0x8] sm:$0xf]
    %v519 = vld [vmem:[#allocation3 + $0xc] sm:$0xff]
    %v520 = vld [vmem:[#allocation3 + $0x14] sm:$0xf]
    %v521 = vld [vmem:[#allocation3 + $0x18] sm:$0xff]
    %v522 = vld [vmem:[#allocation3 + $0x20] sm:$0xf]
    %v523 = vld [vmem:[#allocation3 + $0x24] sm:$0xff]
    %v524 = vld [vmem:[#allocation3 + $0x2c] sm:$0xf]
    %v525 = vld [vmem:[#allocation3 + $0x30] sm:$0xff]
    %v526 = vld [vmem:[#allocation3 + $0x38] sm:$0xf]
    %v527 = vld [vmem:[#allocation3 + $0x3c] sm:$0xff]
    %v528 = vld [vmem:[#allocation3 + $0x44] sm:$0xf]
    %v529 = vld [vmem:[#allocation3 + $0x48] sm:$0xff]
    %v530 = vld [vmem:[#allocation3 + $0x50] sm:$0xf]
    %v531 = vld [vmem:[#allocation3 + $0x54] sm:$0xff]
    %v532 = vld [vmem:[#allocation3 + $0x5c] sm:$0xf]
    %v533 = vld [vmem:[#allocation3 + $0x60] sm:$0xff]
    %v534 = vld [vmem:[#allocation3 + $0x68] sm:$0xf]
    %v535 = vld [vmem:[#allocation3 + $0x6c] sm:$0xff]
    %v536 = vld [vmem:[#allocation3 + $0x74] sm:$0xf]
    %v537 = vld [vmem:[#allocation3 + $0x78] sm:$0xff]
    %v538 = vld [vmem:[#allocation3 + $0x80] sm:$0xf]
    %v539 = vld [vmem:[#allocation3 + $0x84] sm:$0xff]
    %v540 = vld [vmem:[#allocation3 + $0x8c] sm:$0xf]
    %v541 = vld [vmem:[#allocation3 + $0x90] sm:$0xff]
    %v542 = vld [vmem:[#allocation3 + $0x98] sm:$0xf]
    %v543 = vld [vmem:[#allocation3 + $0x9c] sm:$0xff]
    %v544 = vld [vmem:[#allocation3 + $0xa4] sm:$0xf]
    %v545 = vld [vmem:[#allocation3 + $0xa8] sm:$0xff]
    %v546 = vld [vmem:[#allocation3 + $0xb0] sm:$0xf]
    %v547 = vld [vmem:[#allocation3 + $0xb4] sm:$0xff]
    %v548 = vld [vmem:[#allocation3 + $0xbc] sm:$0xf]
    %v549 = vld [vmem:[#allocation3 + $0xc0] sm:$0xff]
    %v550 = vld [vmem:[#allocation3 + $0xc8] sm:$0xf]
    %v551 = vld [vmem:[#allocation3 + $0xcc] sm:$0xff]
    %v552 = vld [vmem:[#allocation3 + $0xd4] sm:$0xf]
    %v553 = vld [vmem:[#allocation3 + $0xd8] sm:$0xff]
    %v554 = vld [vmem:[#allocation3 + $0xe0] sm:$0xf]
    %v555 = vld [vmem:[#allocation3 + $0xe4] sm:$0xff]
    %v556 = vld [vmem:[#allocation3 + $0xec] sm:$0xf]
    %v557 = vld [vmem:[#allocation3 + $0xf0] sm:$0xff]
    %v558 = vld [vmem:[#allocation3 + $0xf8] sm:$0xf]
    %v559 = vld [vmem:[#allocation3 + $0xfc] sm:$0xff]
    %v560 = vld [vmem:[#allocation3 + $0x104] sm:$0xf]
    %v561 = vld [vmem:[#allocation3 + $0x108] sm:$0xff]
    %v562 = vld [vmem:[#allocation3 + $0x110] sm:$0xf]
    %v563 = vld [vmem:[#allocation3 + $0x114] sm:$0xff]
    %v564 = vld [vmem:[#allocation3 + $0x11c] sm:$0xf]
    %v565 = vld [vmem:[#allocation3 + $0x120] sm:$0xff]
    %v566 = vld [vmem:[#allocation3 + $0x128] sm:$0xf]
    %v567 = vld [vmem:[#allocation3 + $0x12c] sm:$0xff]
    %v568 = vld [vmem:[#allocation3 + $0x134] sm:$0xf]
    %v569 = vld [vmem:[#allocation3 + $0x138] sm:$0xff]
    %v570 = vld [vmem:[#allocation3 + $0x140] sm:$0xf]
    %v571 = vld [vmem:[#allocation3 + $0x144] sm:$0xff]
    %v572 = vld [vmem:[#allocation3 + $0x14c] sm:$0xf]
    %v573 = vld [vmem:[#allocation3 + $0x150] sm:$0xff]
    %v574 = vld [vmem:[#allocation3 + $0x158] sm:$0xf]
    %v575 = vld [vmem:[#allocation3 + $0x15c] sm:$0xff]
    %v576 = vld [vmem:[#allocation3 + $0x164] sm:$0xf]
    %v577 = vld [vmem:[#allocation3 + $0x168] sm:$0xff]
    %v578 = vld [vmem:[#allocation3 + $0x170] sm:$0xf]
    %v579 = vld [vmem:[#allocation3 + $0x174] sm:$0xff]
    %v580 = vld [vmem:[#allocation3 + $0x17c] sm:$0xf]
    %v581 = vld [vmem:[#allocation3 + $0x180] sm:$0xff]
    %v582 = vld [vmem:[#allocation3 + $0x188] sm:$0xf]
    %v583 = vld [vmem:[#allocation3 + $0x18c] sm:$0xff]
    %v584 = vld [vmem:[#allocation3 + $0x194] sm:$0xf]
    %v585 = vld [vmem:[#allocation3 + $0x198] sm:$0xff]
    %v586 = vld [vmem:[#allocation3 + $0x1a0] sm:$0xf]
    %v587 = vld [vmem:[#allocation3 + $0x1a4] sm:$0xff]
    %v588 = vld [vmem:[#allocation3 + $0x1ac] sm:$0xf]
    %v589 = vld [vmem:[#allocation3 + $0x1b0] sm:$0xff]
    %v590 = vld [vmem:[#allocation3 + $0x1b8] sm:$0xf]
    %v591 = vld [vmem:[#allocation3 + $0x1bc] sm:$0xff]
    %v592 = vld [vmem:[#allocation3 + $0x1c4] sm:$0xf]
    %v593 = vld [vmem:[#allocation3 + $0x1c8] sm:$0xff]
    %v594 = vld [vmem:[#allocation3 + $0x1d0] sm:$0xf]
    %v595 = vld [vmem:[#allocation3 + $0x1d4] sm:$0xff]
    %v596 = vld [vmem:[#allocation3 + $0x1dc] sm:$0xf]
    %v597 = vld [vmem:[#allocation3 + $0x1e0] sm:$0xff]
    %v598 = vld [vmem:[#allocation3 + $0x1e8] sm:$0xf]
    %v599 = vld [vmem:[#allocation3 + $0x1ec] sm:$0xff]
    %v600 = vld [vmem:[#allocation3 + $0x1f4] sm:$0xf]
    %v601 = vld [vmem:[#allocation3 + $0x1f8] sm:$0xff]
    %v602 = vld [vmem:[#allocation3 + $0x200] sm:$0xf]
    %v603 = vld [vmem:[#allocation3 + $0x204] sm:$0xff]
    %v604 = vld [vmem:[#allocation3 + $0x20c] sm:$0xf]
    %v605 = vld [vmem:[#allocation3 + $0x210] sm:$0xff]
    %v606 = vld [vmem:[#allocation3 + $0x218] sm:$0xf]
    %v607 = vld [vmem:[#allocation3 + $0x21c] sm:$0xff]
    %v608 = vld [vmem:[#allocation3 + $0x224] sm:$0xf]
    %v609 = vld [vmem:[#allocation3 + $0x228] sm:$0xff]
    %v610 = vld [vmem:[#allocation3 + $0x230] sm:$0xf]
    %v611 = vld [vmem:[#allocation3 + $0x234] sm:$0xff]
    %v612 = vld [vmem:[#allocation3 + $0x23c] sm:$0xf]
    %v613 = vld [vmem:[#allocation3 + $0x240] sm:$0xff]
    %v614 = vld [vmem:[#allocation3 + $0x248] sm:$0xf]
    %v615 = vld [vmem:[#allocation3 + $0x24c] sm:$0xff]
    %v616 = vld [vmem:[#allocation3 + $0x254] sm:$0xf]
    %v617 = vld [vmem:[%s4] sm:$0x7]
    %v619 = vlaneseq
    %v620 = vshrl.u32 %v619, 7
    %v621 = vsub.s32 0, %v620
    %v622 = vrot.slane %v617, %v621
    %v623 = vlaneseq
    %v624 = vshrl.u32 %v623, 7
    %v625 = vsub.s32 1, %v624
    %v626 = vrot.slane %v617, %v625
    %v627 = vlaneseq
    %v628 = vshrl.u32 %v627, 7
    %v629 = vsub.s32 2, %v628
    %v630 = vrot.slane %v617, %v629
    %v734 = vunpack.c.l.b16 %v517
    %v735 = vunpack.c.h.b16 %v517
    %v736 = vunpack.c.l.b16 %v518
    %v737 = vunpack.c.l.b16 %v519
    %v738 = vunpack.c.h.b16 %v519
    %v739 = vunpack.c.l.b16 %v520
    %v740 = vunpack.c.l.b16 %v521
    %v741 = vunpack.c.h.b16 %v521
    %v742 = vunpack.c.l.b16 %v522
    %v743 = vunpack.c.l.b16 %v523
    %v744 = vunpack.c.h.b16 %v523
    %v745 = vunpack.c.l.b16 %v524
    %v746 = vunpack.c.l.b16 %v525
    %v747 = vunpack.c.h.b16 %v525
    %v748 = vunpack.c.l.b16 %v526
    %v749 = vunpack.c.l.b16 %v527
    %v750 = vunpack.c.h.b16 %v527
    %v751 = vunpack.c.l.b16 %v528
    %v752 = vunpack.c.l.b16 %v529
    %v753 = vunpack.c.h.b16 %v529
    %v754 = vunpack.c.l.b16 %v530
    %v755 = vunpack.c.l.b16 %v531
    %v756 = vunpack.c.h.b16 %v531
    %v757 = vunpack.c.l.b16 %v532
    %v758 = vunpack.c.l.b16 %v533
    %v759 = vunpack.c.h.b16 %v533
    %v760 = vunpack.c.l.b16 %v534
    %v761 = vunpack.c.l.b16 %v535
    %v762 = vunpack.c.h.b16 %v535
    %v763 = vunpack.c.l.b16 %v536
    %v764 = vunpack.c.l.b16 %v537
    %v765 = vunpack.c.h.b16 %v537
    %v766 = vunpack.c.l.b16 %v538
    %v767 = vunpack.c.l.b16 %v539
    %v768 = vunpack.c.h.b16 %v539
    %v769 = vunpack.c.l.b16 %v540
    %v770 = vunpack.c.l.b16 %v541
    %v771 = vunpack.c.h.b16 %v541
    %v772 = vunpack.c.l.b16 %v542
    %v773 = vunpack.c.l.b16 %v543
    %v774 = vunpack.c.h.b16 %v543
    %v775 = vunpack.c.l.b16 %v544
    %v776 = vunpack.c.l.b16 %v545
    %v777 = vunpack.c.h.b16 %v545
    %v778 = vunpack.c.l.b16 %v546
    %v779 = vunpack.c.l.b16 %v547
    %v780 = vunpack.c.h.b16 %v547
    %v781 = vunpack.c.l.b16 %v548
    %v782 = vunpack.c.l.b16 %v549
    %v783 = vunpack.c.h.b16 %v549
    %v784 = vunpack.c.l.b16 %v550
    %v785 = vunpack.c.l.b16 %v551
    %v786 = vunpack.c.h.b16 %v551
    %v787 = vunpack.c.l.b16 %v552
    %v788 = vunpack.c.l.b16 %v553
    %v789 = vunpack.c.h.b16 %v553
    %v790 = vunpack.c.l.b16 %v554
    %v791 = vunpack.c.l.b16 %v555
    %v792 = vunpack.c.h.b16 %v555
    %v793 = vunpack.c.l.b16 %v556
    %v794 = vunpack.c.l.b16 %v557
    %v795 = vunpack.c.h.b16 %v557
    %v796 = vunpack.c.l.b16 %v558
    %v797 = vunpack.c.l.b16 %v559
    %v798 = vunpack.c.h.b16 %v559
    %v799 = vunpack.c.l.b16 %v560
    %v800 = vunpack.c.l.b16 %v561
    %v801 = vunpack.c.h.b16 %v561
    %v802 = vunpack.c.l.b16 %v562
    %v803 = vunpack.c.l.b16 %v563
    %v804 = vunpack.c.h.b16 %v563
    %v805 = vunpack.c.l.b16 %v564
    %v806 = vunpack.c.l.b16 %v565
    %v807 = vunpack.c.h.b16 %v565
    %v808 = vunpack.c.l.b16 %v566
    %v809 = vunpack.c.l.b16 %v567
    %v810 = vunpack.c.h.b16 %v567
    %v811 = vunpack.c.l.b16 %v568
    %v812 = vunpack.c.l.b16 %v569
    %v813 = vunpack.c.h.b16 %v569
    %v814 = vunpack.c.l.b16 %v570
    %v815 = vunpack.c.l.b16 %v571
    %v816 = vunpack.c.h.b16 %v571
    %v817 = vunpack.c.l.b16 %v572
    %v818 = vunpack.c.l.b16 %v573
    %v819 = vunpack.c.h.b16 %v573
    %v820 = vunpack.c.l.b16 %v574
    %v821 = vunpack.c.l.b16 %v575
    %v822 = vunpack.c.h.b16 %v575
    %v823 = vunpack.c.l.b16 %v576
    %v824 = vunpack.c.l.b16 %v577
    %v825 = vunpack.c.h.b16 %v577
    %v826 = vunpack.c.l.b16 %v578
    %v827 = vunpack.c.l.b16 %v579
    %v828 = vunpack.c.h.b16 %v579
    %v829 = vunpack.c.l.b16 %v580
    %v830 = vunpack.c.l.b16 %v581
    %v831 = vunpack.c.h.b16 %v581
    %v832 = vunpack.c.l.b16 %v582
    %v833 = vunpack.c.l.b16 %v583
    %v834 = vunpack.c.h.b16 %v583
    %v835 = vunpack.c.l.b16 %v584
    %v836 = vunpack.c.l.b16 %v585
    %v837 = vunpack.c.h.b16 %v585
    %v838 = vunpack.c.l.b16 %v586
    %v839 = vunpack.c.l.b16 %v587
    %v840 = vunpack.c.h.b16 %v587
    %v841 = vunpack.c.l.b16 %v588
    %v842 = vunpack.c.l.b16 %v589
    %v843 = vunpack.c.h.b16 %v589
    %v844 = vunpack.c.l.b16 %v590
    %v845 = vunpack.c.l.b16 %v591
    %v846 = vunpack.c.h.b16 %v591
    %v847 = vunpack.c.l.b16 %v592
    %v848 = vunpack.c.l.b16 %v593
    %v849 = vunpack.c.h.b16 %v593
    %v850 = vunpack.c.l.b16 %v594
    %v851 = vunpack.c.l.b16 %v595
    %v852 = vunpack.c.h.b16 %v595
    %v853 = vunpack.c.l.b16 %v596
    %v854 = vunpack.c.l.b16 %v597
    %v855 = vunpack.c.h.b16 %v597
    %v856 = vunpack.c.l.b16 %v598
    %v857 = vunpack.c.l.b16 %v599
    %v858 = vunpack.c.h.b16 %v599
    %v859 = vunpack.c.l.b16 %v600
    %v860 = vunpack.c.l.b16 %v601
    %v861 = vunpack.c.h.b16 %v601
    %v862 = vunpack.c.l.b16 %v602
    %v863 = vunpack.c.l.b16 %v603
    %v864 = vunpack.c.h.b16 %v603
    %v865 = vunpack.c.l.b16 %v604
    %v866 = vunpack.c.l.b16 %v605
    %v867 = vunpack.c.h.b16 %v605
    %v868 = vunpack.c.l.b16 %v606
    %v869 = vunpack.c.l.b16 %v607
    %v870 = vunpack.c.h.b16 %v607
    %v871 = vunpack.c.l.b16 %v608
    %v872 = vunpack.c.l.b16 %v609
    %v873 = vunpack.c.h.b16 %v609
    %v874 = vunpack.c.l.b16 %v610
    %v875 = vunpack.c.l.b16 %v611
    %v876 = vunpack.c.h.b16 %v611
    %v877 = vunpack.c.l.b16 %v612
    %v878 = vunpack.c.l.b16 %v613
    %v879 = vunpack.c.h.b16 %v613
    %v880 = vunpack.c.l.b16 %v614
    %v881 = vunpack.c.l.b16 %v615
    %v882 = vunpack.c.h.b16 %v615
    %v883 = vunpack.c.l.b16 %v616
    %v884 = vpack.c.b16 %v737, %v734
    %v885 = vpack.c.b16 %v738, %v735
    %v886 = vpack.c.b16 %v739, %v736
    %v887 = vpack.c.b16 %v743, %v740
    %v888 = vpack.c.b16 %v744, %v741
    %v889 = vpack.c.b16 %v745, %v742
    %v890 = vpack.c.b16 %v749, %v746
    %v891 = vpack.c.b16 %v750, %v747
    %v892 = vpack.c.b16 %v751, %v748
    %v893 = vpack.c.b16 %v755, %v752
    %v894 = vpack.c.b16 %v756, %v753
    %v895 = vpack.c.b16 %v757, %v754
    %v896 = vpack.c.b16 %v761, %v758
    %v897 = vpack.c.b16 %v762, %v759
    %v898 = vpack.c.b16 %v763, %v760
    %v899 = vpack.c.b16 %v767, %v764
    %v900 = vpack.c.b16 %v768, %v765
    %v901 = vpack.c.b16 %v769, %v766
    %v902 = vpack.c.b16 %v773, %v770
    %v903 = vpack.c.b16 %v774, %v771
    %v904 = vpack.c.b16 %v775, %v772
    %v905 = vpack.c.b16 %v779, %v776
    %v906 = vpack.c.b16 %v780, %v777
    %v907 = vpack.c.b16 %v781, %v778
    %v908 = vpack.c.b16 %v785, %v782
    %v909 = vpack.c.b16 %v786, %v783
    %v910 = vpack.c.b16 %v787, %v784
    %v911 = vpack.c.b16 %v791, %v788
    %v912 = vpack.c.b16 %v792, %v789
    %v913 = vpack.c.b16 %v793, %v790
    %v914 = vpack.c.b16 %v797, %v794
    %v915 = vpack.c.b16 %v798, %v795
    %v916 = vpack.c.b16 %v799, %v796
    %v917 = vpack.c.b16 %v803, %v800
    %v918 = vpack.c.b16 %v804, %v801
    %v919 = vpack.c.b16 %v805, %v802
    %v920 = vpack.c.b16 %v809, %v806
    %v921 = vpack.c.b16 %v810, %v807
    %v922 = vpack.c.b16 %v811, %v808
    %v923 = vpack.c.b16 %v815, %v812
    %v924 = vpack.c.b16 %v816, %v813
    %v925 = vpack.c.b16 %v817, %v814
    %v926 = vpack.c.b16 %v821, %v818
    %v927 = vpack.c.b16 %v822, %v819
    %v928 = vpack.c.b16 %v823, %v820
    %v929 = vpack.c.b16 %v827, %v824
    %v930 = vpack.c.b16 %v828, %v825
    %v931 = vpack.c.b16 %v829, %v826
    %v932 = vpack.c.b16 %v833, %v830
    %v933 = vpack.c.b16 %v834, %v831
    %v934 = vpack.c.b16 %v835, %v832
    %v935 = vpack.c.b16 %v839, %v836
    %v936 = vpack.c.b16 %v840, %v837
    %v937 = vpack.c.b16 %v841, %v838
    %v938 = vpack.c.b16 %v845, %v842
    %v939 = vpack.c.b16 %v846, %v843
    %v940 = vpack.c.b16 %v847, %v844
    %v941 = vpack.c.b16 %v851, %v848
    %v942 = vpack.c.b16 %v852, %v849
    %v943 = vpack.c.b16 %v853, %v850
    %v944 = vpack.c.b16 %v857, %v854
    %v945 = vpack.c.b16 %v858, %v855
    %v946 = vpack.c.b16 %v859, %v856
    %v947 = vpack.c.b16 %v863, %v860
    %v948 = vpack.c.b16 %v864, %v861
    %v949 = vpack.c.b16 %v865, %v862
    %v950 = vpack.c.b16 %v869, %v866
    %v951 = vpack.c.b16 %v870, %v867
    %v952 = vpack.c.b16 %v871, %v868
    %v953 = vpack.c.b16 %v875, %v872
    %v954 = vpack.c.b16 %v876, %v873
    %v955 = vpack.c.b16 %v877, %v874
    %v956 = vpack.c.b16 %v881, %v878
    %v957 = vpack.c.b16 %v882, %v879
    %v958 = vpack.c.b16 %v883, %v880
    %vm1034 = vcmask 130048
    %v1036 = vsel %vm1034, %v488, 0
    %v1039 = vsel %vm1034, %v492, 0
    %v1042 = vsel %vm1034, %v496, 0
    %v1045 = vsel %vm1034, %v500, 0
    %v1048 = vsel %vm1034, %v504, 0
    %v1051 = vsel %vm1034, %v508, 0
    %v1054 = vsel %vm1034, %v512, 0
    %v1057 = vsel %vm1034, %v516, 0
    %1059 = vmatprep.subr.bf16.mxu0 %v885
    %1060 = vmatpush1.bf16.msra.mxu0 %v884
    %1061 = vmatprep.subr.bf16.mxu0 %v888
    %1062 = vmatpush1.bf16.msra.mxu0 %v887
    %1063 = vmatprep.subr.bf16.mxu0 %v891
    %1064 = vmatpush1.bf16.msra.mxu0 %v890
    %1065 = vmatprep.subr.bf16.mxu0 %v894
    %1066 = vmatpush1.bf16.msra.mxu0 %v893
    %1067 = vmatprep.subr.bf16.mxu0 %v897
    %1068 = vmatpush1.bf16.msra.mxu0 %v896
    %1069 = vmatprep.subr.bf16.mxu0 %v900
    %1070 = vmatpush1.bf16.msra.mxu0 %v899
    %1071 = vmatprep.subr.bf16.mxu0 %v903
    %1072 = vmatpush1.bf16.msra.mxu0 %v902
    %1073 = vmatprep.subr.bf16.mxu0 %v906
    %1074 = vmatpush1.bf16.msra.mxu0 %v905
    %1075 = vmatprep.subr.bf16.mxu0 %v909
    %1076 = vmatpush1.bf16.msra.mxu0 %v908
    %1077 = vmatprep.subr.bf16.mxu0 %v912
    %1078 = vmatpush1.bf16.msra.mxu0 %v911
    %1079 = vmatprep.subr.bf16.mxu0 %v915
    %1080 = vmatpush1.bf16.msra.mxu0 %v914
    %1081 = vmatprep.subr.bf16.mxu0 %v918
    %1082 = vmatpush1.bf16.msra.mxu0 %v917
    %1083 = vmatprep.subr.bf16.mxu0 %v921
    %1084 = vmatpush1.bf16.msra.mxu0 %v920
    %1085 = vmatprep.subr.bf16.mxu0 %v924
    %1086 = vmatpush1.bf16.msra.mxu0 %v923
    %1087 = vmatprep.subr.bf16.mxu0 %v927
    %1088 = vmatpush1.bf16.msra.mxu0 %v926
    %1089 = vmatprep.subr.bf16.mxu0 %v930
    %1090 = vmatpush1.bf16.msra.mxu0 %v929
    %1091 = vmatprep.mubr.bf16.mxu0 %v486
    %1092 = vmatmul.mubr.bf16.gmra.mrb[0].mxu0 %v485
    %v1093 = vpop.f32.mrb[0].mxu0
    %v1094 = vadd.f32 %v622, %v1093
    %v1095 = vpop.f32.mrb[0].mxu0
    %v1096 = vadd.f32 %v626, %v1095
    %v1097 = vpop.f32.mrb[0].mxu0
    %v1098 = vadd.f32 %v622, %v1097
    %v1099 = vpop.f32.mrb[0].mxu0
    %v1100 = vadd.f32 %v626, %v1099
    %1101 = vmatprep.mubr.bf16.mxu0 %v490
    %1102 = vmatmul.mubr.bf16.gmra.mrb[0].mxu0 %v489
    %v1103 = vpop.f32.mrb[0].mxu0
    %v1104 = vadd.f32 %v622, %v1103
    %v1105 = vpop.f32.mrb[0].mxu0
    %v1106 = vadd.f32 %v626, %v1105
    %v1107 = vpop.f32.mrb[0].mxu0
    %v1108 = vadd.f32 %v622, %v1107
    %v1109 = vpop.f32.mrb[0].mxu0
    %v1110 = vadd.f32 %v626, %v1109
    %1111 = vmatprep.mubr.bf16.mxu0 %v494
    %1112 = vmatmul.mubr.bf16.gmra.mrb[0].mxu0 %v493
    %v1113 = vpop.f32.mrb[0].mxu0
    %v1114 = vadd.f32 %v622, %v1113
    %v1115 = vpop.f32.mrb[0].mxu0
    %v1116 = vadd.f32 %v626, %v1115
    %v1117 = vpop.f32.mrb[0].mxu0
    %v1118 = vadd.f32 %v622, %v1117
    %v1119 = vpop.f32.mrb[0].mxu0
    %v1120 = vadd.f32 %v626, %v1119
    %1121 = vmatprep.mubr.bf16.mxu0 %v498
    %1122 = vmatmul.mubr.bf16.gmra.mrb[0].mxu0 %v497
    %v1123 = vpop.f32.mrb[0].mxu0
    %v1124 = vadd.f32 %v622, %v1123
    %v1125 = vpop.f32.mrb[0].mxu0
    %v1126 = vadd.f32 %v626, %v1125
    %v1127 = vpop.f32.mrb[0].mxu0
    %v1128 = vadd.f32 %v622, %v1127
    %v1129 = vpop.f32.mrb[0].mxu0
    %v1130 = vadd.f32 %v626, %v1129
    %1131 = vmatprep.mubr.bf16.mxu0 %v502
    %1132 = vmatmul.mubr.bf16.gmra.mrb[0].mxu0 %v501
    %v1133 = vpop.f32.mrb[0].mxu0
    %v1134 = vadd.f32 %v622, %v1133
    %v1135 = vpop.f32.mrb[0].mxu0
    %v1136 = vadd.f32 %v626, %v1135
    %v1137 = vpop.f32.mrb[0].mxu0
    %v1138 = vadd.f32 %v622, %v1137
    %v1139 = vpop.f32.mrb[0].mxu0
    %v1140 = vadd.f32 %v626, %v1139
    %1141 = vmatprep.mubr.bf16.mxu0 %v506
    %1142 = vmatmul.mubr.bf16.gmra.mrb[0].mxu0 %v505
    %v1143 = vpop.f32.mrb[0].mxu0
    %v1144 = vadd.f32 %v622, %v1143
    %v1145 = vpop.f32.mrb[0].mxu0
    %v1146 = vadd.f32 %v626, %v1145
    %v1147 = vpop.f32.mrb[0].mxu0
    %v1148 = vadd.f32 %v622, %v1147
    %v1149 = vpop.f32.mrb[0].mxu0
    %v1150 = vadd.f32 %v626, %v1149
    %1151 = vmatprep.mubr.bf16.mxu0 %v510
    %1152 = vmatmul.mubr.bf16.gmra.mrb[0].mxu0 %v509
    %v1153 = vpop.f32.mrb[0].mxu0
    %v1154 = vadd.f32 %v622, %v1153
    %v1155 = vpop.f32.mrb[0].mxu0
    %v1156 = vadd.f32 %v626, %v1155
    %v1157 = vpop.f32.mrb[0].mxu0
    %v1158 = vadd.f32 %v622, %v1157
    %v1159 = vpop.f32.mrb[0].mxu0
    %v1160 = vadd.f32 %v626, %v1159
    %1161 = vmatprep.mubr.bf16.mxu0 %v514
    %1162 = vmatmul.mubr.bf16.gmra.mrb[0].mxu0 %v513
    %v1163 = vpop.f32.mrb[0].mxu0
    %v1164 = vadd.f32 %v622, %v1163
    %v1165 = vpop.f32.mrb[0].mxu0
    %v1166 = vadd.f32 %v626, %v1165
    %v1167 = vpop.f32.mrb[0].mxu0
    %v1168 = vadd.f32 %v622, %v1167
    %v1169 = vpop.f32.mrb[0].mxu0
    %v1170 = vadd.f32 %v626, %v1169
    %1171 = vdwg.mxu0
    %1172 = vmatprep.subr.bf16.mxu0 %v933
    %1173 = vmatpush1.bf16.msra.mxu0 %v932
    %1174 = vmatprep.subr.bf16.mxu0 %v936
    %1175 = vmatpush1.bf16.msra.mxu0 %v935
    %1176 = vmatprep.subr.bf16.mxu0 %v939
    %1177 = vmatpush1.bf16.msra.mxu0 %v938
    %1178 = vmatprep.subr.bf16.mxu0 %v942
    %1179 = vmatpush1.bf16.msra.mxu0 %v941
    %1180 = vmatprep.subr.bf16.mxu0 %v945
    %1181 = vmatpush1.bf16.msra.mxu0 %v944
    %1182 = vmatprep.subr.bf16.mxu0 %v948
    %1183 = vmatpush1.bf16.msra.mxu0 %v947
    %1184 = vmatprep.subr.bf16.mxu0 %v951
    %1185 = vmatpush1.bf16.msra.mxu0 %v950
    %1186 = vmatprep.subr.bf16.mxu0 %v954
    %1187 = vmatpush1.bf16.msra.mxu0 %v953
    %1188 = vmatprep.subr.bf16.mxu0 %v957
    %1189 = vmatpush1.bf16.msra.mxu0 %v956
    %1190 = vmatprep.subr.bf16.mxu0 0
    %1191 = vmatpush1.bf16.msra.mxu0 0
    %1192 = vmatprep.subr.bf16.mxu0 0
    %1193 = vmatpush1.bf16.msra.mxu0 0
    %1194 = vmatprep.subr.bf16.mxu0 0
    %1195 = vmatpush1.bf16.msra.mxu0 0
    %1196 = vmatprep.subr.bf16.mxu0 0
    %1197 = vmatpush1.bf16.msra.mxu0 0
    %1198 = vmatprep.subr.bf16.mxu0 0
    %1199 = vmatpush1.bf16.msra.mxu0 0
    %1200 = vmatprep.subr.bf16.mxu0 0
    %1201 = vmatpush1.bf16.msra.mxu0 0
    %1202 = vmatprep.subr.bf16.mxu0 0
    %1203 = vmatpush1.bf16.msra.mxu0 0
    %1204 = vmatprep.mubr.bf16.mxu0 %v1036
    %1205 = vmatmul.mubr.bf16.gmra.mrb[0].mxu0 %v487
    %v1206 = vpop.f32.mrb[0].mxu0
    %v1207 = vadd.f32 %v1094, %v1206
    %v1208 = vpop.f32.mrb[0].mxu0
    %v1209 = vadd.f32 %v1096, %v1208
    %v1210 = vpop.f32.mrb[0].mxu0
    %v1211 = vadd.f32 %v1098, %v1210
    %v1212 = vpop.f32.mrb[0].mxu0
    %v1213 = vadd.f32 %v1100, %v1212
    %1214 = vmatprep.mubr.bf16.mxu0 %v1039
    %1215 = vmatmul.mubr.bf16.gmra.mrb[0].mxu0 %v491
    %v1216 = vpop.f32.mrb[0].mxu0
    %v1217 = vadd.f32 %v1104, %v1216
    %v1218 = vpop.f32.mrb[0].mxu0
    %v1219 = vadd.f32 %v1106, %v1218
    %v1220 = vpop.f32.mrb[0].mxu0
    %v1221 = vadd.f32 %v1108, %v1220
    %v1222 = vpop.f32.mrb[0].mxu0
    %v1223 = vadd.f32 %v1110, %v1222
    %1224 = vmatprep.mubr.bf16.mxu0 %v1042
    %1225 = vmatmul.mubr.bf16.gmra.mrb[0].mxu0 %v495
    %v1226 = vpop.f32.mrb[0].mxu0
    %v1227 = vadd.f32 %v1114, %v1226
    %v1228 = vpop.f32.mrb[0].mxu0
    %v1229 = vadd.f32 %v1116, %v1228
    %v1230 = vpop.f32.mrb[0].mxu0
    %v1231 = vadd.f32 %v1118, %v1230
    %v1232 = vpop.f32.mrb[0].mxu0
    %v1233 = vadd.f32 %v1120, %v1232
    %1234 = vmatprep.mubr.bf16.mxu0 %v1045
    %1235 = vmatmul.mubr.bf16.gmra.mrb[0].mxu0 %v499
    %v1236 = vpop.f32.mrb[0].mxu0
    %v1237 = vadd.f32 %v1124, %v1236
    %v1238 = vpop.f32.mrb[0].mxu0
    %v1239 = vadd.f32 %v1126, %v1238
    %v1240 = vpop.f32.mrb[0].mxu0
    %v1241 = vadd.f32 %v1128, %v1240
    %v1242 = vpop.f32.mrb[0].mxu0
    %v1243 = vadd.f32 %v1130, %v1242
    %1244 = vmatprep.mubr.bf16.mxu0 %v1048
    %1245 = vmatmul.mubr.bf16.gmra.mrb[0].mxu0 %v503
    %v1246 = vpop.f32.mrb[0].mxu0
    %v1247 = vadd.f32 %v1134, %v1246
    %v1248 = vpop.f32.mrb[0].mxu0
    %v1249 = vadd.f32 %v1136, %v1248
    %v1250 = vpop.f32.mrb[0].mxu0
    %v1251 = vadd.f32 %v1138, %v1250
    %v1252 = vpop.f32.mrb[0].mxu0
    %v1253 = vadd.f32 %v1140, %v1252
    %1254 = vmatprep.mubr.bf16.mxu0 %v1051
    %1255 = vmatmul.mubr.bf16.gmra.mrb[0].mxu0 %v507
    %v1256 = vpop.f32.mrb[0].mxu0
    %v1257 = vadd.f32 %v1144, %v1256
    %v1258 = vpop.f32.mrb[0].mxu0
    %v1259 = vadd.f32 %v1146, %v1258
    %v1260 = vpop.f32.mrb[0].mxu0
    %v1261 = vadd.f32 %v1148, %v1260
    %v1262 = vpop.f32.mrb[0].mxu0
    %v1263 = vadd.f32 %v1150, %v1262
    %1264 = vmatprep.mubr.bf16.mxu0 %v1054
    %1265 = vmatmul.mubr.bf16.gmra.mrb[0].mxu0 %v511
    %v1266 = vpop.f32.mrb[0].mxu0
    %v1267 = vadd.f32 %v1154, %v1266
    %v1268 = vpop.f32.mrb[0].mxu0
    %v1269 = vadd.f32 %v1156, %v1268
    %v1270 = vpop.f32.mrb[0].mxu0
    %v1271 = vadd.f32 %v1158, %v1270
    %v1272 = vpop.f32.mrb[0].mxu0
    %v1273 = vadd.f32 %v1160, %v1272
    %1274 = vmatprep.mubr.bf16.mxu0 %v1057
    %1275 = vmatmul.mubr.bf16.gmra.mrb[0].mxu0 %v515
    %v1276 = vpop.f32.mrb[0].mxu0
    %v1277 = vadd.f32 %v1164, %v1276
    %v1278 = vpop.f32.mrb[0].mxu0
    %v1279 = vadd.f32 %v1166, %v1278
    %v1280 = vpop.f32.mrb[0].mxu0
    %v1281 = vadd.f32 %v1168, %v1280
    %v1282 = vpop.f32.mrb[0].mxu0
    %v1283 = vadd.f32 %v1170, %v1282
    %1284 = vdwg.mxu0
    %1285 = vmatprep.subr.bf16.mxu0 0
    %1286 = vmatpush1.bf16.msra.mxu0 %v886
    %1287 = vmatprep.subr.bf16.mxu0 0
    %1288 = vmatpush1.bf16.msra.mxu0 %v889
    %1289 = vmatprep.subr.bf16.mxu0 0
    %1290 = vmatpush1.bf16.msra.mxu0 %v892
    %1291 = vmatprep.subr.bf16.mxu0 0
    %1292 = vmatpush1.bf16.msra.mxu0 %v895
    %1293 = vmatprep.subr.bf16.mxu0 0
    %1294 = vmatpush1.bf16.msra.mxu0 %v898
    %1295 = vmatprep.subr.bf16.mxu0 0
    %1296 = vmatpush1.bf16.msra.mxu0 %v901
    %1297 = vmatprep.subr.bf16.mxu0 0
    %1298 = vmatpush1.bf16.msra.mxu0 %v904
    %1299 = vmatprep.subr.bf16.mxu0 0
    %1300 = vmatpush1.bf16.msra.mxu0 %v907
    %1301 = vmatprep.subr.bf16.mxu0 0
    %1302 = vmatpush1.bf16.msra.mxu0 %v910
    %1303 = vmatprep.subr.bf16.mxu0 0
    %1304 = vmatpush1.bf16.msra.mxu0 %v913
    %1305 = vmatprep.subr.bf16.mxu0 0
    %1306 = vmatpush1.bf16.msra.mxu0 %v916
    %1307 = vmatprep.subr.bf16.mxu0 0
    %1308 = vmatpush1.bf16.msra.mxu0 %v919
    %1309 = vmatprep.subr.bf16.mxu0 0
    %1310 = vmatpush1.bf16.msra.mxu0 %v922
    %1311 = vmatprep.subr.bf16.mxu0 0
    %1312 = vmatpush1.bf16.msra.mxu0 %v925
    %1313 = vmatprep.subr.bf16.mxu0 0
    %1314 = vmatpush1.bf16.msra.mxu0 %v928
    %1315 = vmatprep.subr.bf16.mxu0 0
    %1316 = vmatpush1.bf16.msra.mxu0 %v931
    %1317 = vmatprep.mubr.bf16.mxu0 %v486
    %1318 = vmatmul.mubr.bf16.gmra.mrb[0].mxu0 %v485
    %v1319 = vpop.f32.mrb[0].mxu0
    %v1320 = vadd.f32 %v630, %v1319
    %v1321 = vpop.f32.mrb[0].mxu0
    %v1322 = vpop.f32.mrb[0].mxu0
    %v1323 = vadd.f32 %v630, %v1322
    %v1324 = vpop.f32.mrb[0].mxu0
    %1325 = vmatprep.mubr.bf16.mxu0 %v490
    %1326 = vmatmul.mubr.bf16.gmra.mrb[0].mxu0 %v489
    %v1327 = vpop.f32.mrb[0].mxu0
    %v1328 = vadd.f32 %v630, %v1327
    %v1329 = vpop.f32.mrb[0].mxu0
    %v1330 = vpop.f32.mrb[0].mxu0
    %v1331 = vadd.f32 %v630, %v1330
    %v1332 = vpop.f32.mrb[0].mxu0
    %1333 = vmatprep.mubr.bf16.mxu0 %v494
    %1334 = vmatmul.mubr.bf16.gmra.mrb[0].mxu0 %v493
    %v1335 = vpop.f32.mrb[0].mxu0
    %v1336 = vadd.f32 %v630, %v1335
    %v1337 = vpop.f32.mrb[0].mxu0
    %v1338 = vpop.f32.mrb[0].mxu0
    %v1339 = vadd.f32 %v630, %v1338
    %v1340 = vpop.f32.mrb[0].mxu0
    %1341 = vmatprep.mubr.bf16.mxu0 %v498
    %1342 = vmatmul.mubr.bf16.gmra.mrb[0].mxu0 %v497
    %v1343 = vpop.f32.mrb[0].mxu0
    %v1344 = vadd.f32 %v630, %v1343
    %v1345 = vpop.f32.mrb[0].mxu0
    %v1346 = vpop.f32.mrb[0].mxu0
    %v1347 = vadd.f32 %v630, %v1346
    %v1348 = vpop.f32.mrb[0].mxu0
    %1349 = vmatprep.mubr.bf16.mxu0 %v502
    %1350 = vmatmul.mubr.bf16.gmra.mrb[0].mxu0 %v501
    %v1351 = vpop.f32.mrb[0].mxu0
    %v1352 = vadd.f32 %v630, %v1351
    %v1353 = vpop.f32.mrb[0].mxu0
    %v1354 = vpop.f32.mrb[0].mxu0
    %v1355 = vadd.f32 %v630, %v1354
    %v1356 = vpop.f32.mrb[0].mxu0
    %1357 = vmatprep.mubr.bf16.mxu0 %v506
    %1358 = vmatmul.mubr.bf16.gmra.mrb[0].mxu0 %v505
    %v1359 = vpop.f32.mrb[0].mxu0
    %v1360 = vadd.f32 %v630, %v1359
    %v1361 = vpop.f32.mrb[0].mxu0
    %v1362 = vpop.f32.mrb[0].mxu0
    %v1363 = vadd.f32 %v630, %v1362
    %v1364 = vpop.f32.mrb[0].mxu0
    %1365 = vmatprep.mubr.bf16.mxu0 %v510
    %1366 = vmatmul.mubr.bf16.gmra.mrb[0].mxu0 %v509
    %v1367 = vpop.f32.mrb[0].mxu0
    %v1368 = vadd.f32 %v630, %v1367
    %v1369 = vpop.f32.mrb[0].mxu0
    %v1370 = vpop.f32.mrb[0].mxu0
    %v1371 = vadd.f32 %v630, %v1370
    %v1372 = vpop.f32.mrb[0].mxu0
    %1373 = vmatprep.mubr.bf16.mxu0 %v514
    %1374 = vmatmul.mubr.bf16.gmra.mrb[0].mxu0 %v513
    %v1375 = vpop.f32.mrb[0].mxu0
    %v1376 = vadd.f32 %v630, %v1375
    %v1377 = vpop.f32.mrb[0].mxu0
    %v1378 = vpop.f32.mrb[0].mxu0
    %v1379 = vadd.f32 %v630, %v1378
    %v1380 = vpop.f32.mrb[0].mxu0
    %1381 = vdwg.mxu0
    %1382 = vmatprep.subr.bf16.mxu0 0
    %1383 = vmatpush1.bf16.msra.mxu0 %v934
    %1384 = vmatprep.subr.bf16.mxu0 0
    %1385 = vmatpush1.bf16.msra.mxu0 %v937
    %1386 = vmatprep.subr.bf16.mxu0 0
    %1387 = vmatpush1.bf16.msra.mxu0 %v940
    %1388 = vmatprep.subr.bf16.mxu0 0
    %1389 = vmatpush1.bf16.msra.mxu0 %v943
    %1390 = vmatprep.subr.bf16.mxu0 0
    %1391 = vmatpush1.bf16.msra.mxu0 %v946
    %1392 = vmatprep.subr.bf16.mxu0 0
    %1393 = vmatpush1.bf16.msra.mxu0 %v949
    %1394 = vmatprep.subr.bf16.mxu0 0
    %1395 = vmatpush1.bf16.msra.mxu0 %v952
    %1396 = vmatprep.subr.bf16.mxu0 0
    %1397 = vmatpush1.bf16.msra.mxu0 %v955
    %1398 = vmatprep.subr.bf16.mxu0 0
    %1399 = vmatpush1.bf16.msra.mxu0 %v958
    %1400 = vmatprep.subr.bf16.mxu0 0
    %1401 = vmatpush1.bf16.msra.mxu0 0
    %1402 = vmatprep.subr.bf16.mxu0 0
    %1403 = vmatpush1.bf16.msra.mxu0 0
    %1404 = vmatprep.subr.bf16.mxu0 0
    %1405 = vmatpush1.bf16.msra.mxu0 0
    %1406 = vmatprep.subr.bf16.mxu0 0
    %1407 = vmatpush1.bf16.msra.mxu0 0
    %1408 = vmatprep.subr.bf16.mxu0 0
    %1409 = vmatpush1.bf16.msra.mxu0 0
    %1410 = vmatprep.subr.bf16.mxu0 0
    %1411 = vmatpush1.bf16.msra.mxu0 0
    %1412 = vmatprep.subr.bf16.mxu0 0
    %1413 = vmatpush1.bf16.msra.mxu0 0
    %1414 = vmatprep.mubr.bf16.mxu0 %v1036
    %1415 = vmatmul.mubr.bf16.gmra.mrb[0].mxu0 %v487
    %v1416 = vpop.f32.mrb[0].mxu0
    %v1417 = vadd.f32 %v1320, %v1416
    %v1418 = vpop.f32.mrb[0].mxu0
    %v1419 = vpop.f32.mrb[0].mxu0
    %v1420 = vadd.f32 %v1323, %v1419
    %v1421 = vpop.f32.mrb[0].mxu0
    %1422 = vmatprep.mubr.bf16.mxu0 %v1039
    %1423 = vmatmul.mubr.bf16.gmra.mrb[0].mxu0 %v491
    %v1424 = vpop.f32.mrb[0].mxu0
    %v1425 = vadd.f32 %v1328, %v1424
    %v1426 = vpop.f32.mrb[0].mxu0
    %v1427 = vpop.f32.mrb[0].mxu0
    %v1428 = vadd.f32 %v1331, %v1427
    %v1429 = vpop.f32.mrb[0].mxu0
    %1430 = vmatprep.mubr.bf16.mxu0 %v1042
    %1431 = vmatmul.mubr.bf16.gmra.mrb[0].mxu0 %v495
    %v1432 = vpop.f32.mrb[0].mxu0
    %v1433 = vadd.f32 %v1336, %v1432
    %v1434 = vpop.f32.mrb[0].mxu0
    %v1435 = vpop.f32.mrb[0].mxu0
    %v1436 = vadd.f32 %v1339, %v1435
    %v1437 = vpop.f32.mrb[0].mxu0
    %1438 = vmatprep.mubr.bf16.mxu0 %v1045
    %1439 = vmatmul.mubr.bf16.gmra.mrb[0].mxu0 %v499
    %v1440 = vpop.f32.mrb[0].mxu0
    %v1441 = vadd.f32 %v1344, %v1440
    %v1442 = vpop.f32.mrb[0].mxu0
    %v1443 = vpop.f32.mrb[0].mxu0
    %v1444 = vadd.f32 %v1347, %v1443
    %v1445 = vpop.f32.mrb[0].mxu0
    %1446 = vmatprep.mubr.bf16.mxu0 %v1048
    %1447 = vmatmul.mubr.bf16.gmra.mrb[0].mxu0 %v503
    %v1448 = vpop.f32.mrb[0].mxu0
    %v1449 = vadd.f32 %v1352, %v1448
    %v1450 = vpop.f32.mrb[0].mxu0
    %v1451 = vpop.f32.mrb[0].mxu0
    %v1452 = vadd.f32 %v1355, %v1451
    %v1453 = vpop.f32.mrb[0].mxu0
    %1454 = vmatprep.mubr.bf16.mxu0 %v1051
    %1455 = vmatmul.mubr.bf16.gmra.mrb[0].mxu0 %v507
    %v1456 = vpop.f32.mrb[0].mxu0
    %v1457 = vadd.f32 %v1360, %v1456
    %v1458 = vpop.f32.mrb[0].mxu0
    %v1459 = vpop.f32.mrb[0].mxu0
    %v1460 = vadd.f32 %v1363, %v1459
    %v1461 = vpop.f32.mrb[0].mxu0
    %1462 = vmatprep.mubr.bf16.mxu0 %v1054
    %1463 = vmatmul.mubr.bf16.gmra.mrb[0].mxu0 %v511
    %v1464 = vpop.f32.mrb[0].mxu0
    %v1465 = vadd.f32 %v1368, %v1464
    %v1466 = vpop.f32.mrb[0].mxu0
    %v1467 = vpop.f32.mrb[0].mxu0
    %v1468 = vadd.f32 %v1371, %v1467
    %v1469 = vpop.f32.mrb[0].mxu0
    %1470 = vmatprep.mubr.bf16.mxu0 %v1057
    %1471 = vmatmul.mubr.bf16.gmra.mrb[0].mxu0 %v515
    %v1472 = vpop.f32.mrb[0].mxu0
    %v1473 = vadd.f32 %v1376, %v1472
    %v1474 = vpop.f32.mrb[0].mxu0
    %v1475 = vpop.f32.mrb[0].mxu0
    %v1476 = vadd.f32 %v1379, %v1475
    %v1477 = vpop.f32.mrb[0].mxu0
    %1478 = vdwg.mxu0
    %v1479 = vmax.f32 %v1207, 0.0
    %v1480 = vmax.f32 %v1209, 0.0
    %v1481 = vmax.f32 %v1417, 0.0
    %v1482 = vmax.f32 %v1211, 0.0
    %v1483 = vmax.f32 %v1213, 0.0
    %v1484 = vmax.f32 %v1420, 0.0
    %v1485 = vmax.f32 %v1217, 0.0
    %v1486 = vmax.f32 %v1219, 0.0
    %v1487 = vmax.f32 %v1425, 0.0
    %v1488 = vmax.f32 %v1221, 0.0
    %v1489 = vmax.f32 %v1223, 0.0
    %v1490 = vmax.f32 %v1428, 0.0
    %v1491 = vmax.f32 %v1227, 0.0
    %v1492 = vmax.f32 %v1229, 0.0
    %v1493 = vmax.f32 %v1433, 0.0
    %v1494 = vmax.f32 %v1231, 0.0
    %v1495 = vmax.f32 %v1233, 0.0
    %v1496 = vmax.f32 %v1436, 0.0
    %v1497 = vmax.f32 %v1237, 0.0
    %v1498 = vmax.f32 %v1239, 0.0
    %v1499 = vmax.f32 %v1441, 0.0
    %v1500 = vmax.f32 %v1241, 0.0
    %v1501 = vmax.f32 %v1243, 0.0
    %v1502 = vmax.f32 %v1444, 0.0
    %v1503 = vmax.f32 %v1247, 0.0
    %v1504 = vmax.f32 %v1249, 0.0
    %v1505 = vmax.f32 %v1449, 0.0
    %v1506 = vmax.f32 %v1251, 0.0
    %v1507 = vmax.f32 %v1253, 0.0
    %v1508 = vmax.f32 %v1452, 0.0
    %v1509 = vmax.f32 %v1257, 0.0
    %v1510 = vmax.f32 %v1259, 0.0
    %v1511 = vmax.f32 %v1457, 0.0
    %v1512 = vmax.f32 %v1261, 0.0
    %v1513 = vmax.f32 %v1263, 0.0
    %v1514 = vmax.f32 %v1460, 0.0
    %v1515 = vmax.f32 %v1267, 0.0
    %v1516 = vmax.f32 %v1269, 0.0
    %v1517 = vmax.f32 %v1465, 0.0
    %v1518 = vmax.f32 %v1271, 0.0
    %v1519 = vmax.f32 %v1273, 0.0
    %v1520 = vmax.f32 %v1468, 0.0
    %v1521 = vmax.f32 %v1277, 0.0
    %v1522 = vmax.f32 %v1279, 0.0
    %v1523 = vmax.f32 %v1473, 0.0
    %v1524 = vmax.f32 %v1281, 0.0
    %v1525 = vmax.f32 %v1283, 0.0
    %v1526 = vmax.f32 %v1476, 0.0
    %v1527 = vpack.c.bf16 %v1482, %v1479
    %v1528 = vpack.c.bf16 %v1483, %v1480
    %v1529 = vpack.c.bf16 %v1484, %v1481
    %v1530 = vpack.c.bf16 %v1488, %v1485
    %v1531 = vpack.c.bf16 %v1489, %v1486
    %v1532 = vpack.c.bf16 %v1490, %v1487
    %v1533 = vpack.c.bf16 %v1494, %v1491
    %v1534 = vpack.c.bf16 %v1495, %v1492
    %v1535 = vpack.c.bf16 %v1496, %v1493
    %v1536 = vpack.c.bf16 %v1500, %v1497
    %v1537 = vpack.c.bf16 %v1501, %v1498
    %v1538 = vpack.c.bf16 %v1502, %v1499
    %v1539 = vpack.c.bf16 %v1506, %v1503
    %v1540 = vpack.c.bf16 %v1507, %v1504
    %v1541 = vpack.c.bf16 %v1508, %v1505
    %v1542 = vpack.c.bf16 %v1512, %v1509
    %v1543 = vpack.c.bf16 %v1513, %v1510
    %v1544 = vpack.c.bf16 %v1514, %v1511
    %v1545 = vpack.c.bf16 %v1518, %v1515
    %v1546 = vpack.c.bf16 %v1519, %v1516
    %v1547 = vpack.c.bf16 %v1520, %v1517
    %v1548 = vpack.c.bf16 %v1524, %v1521
    %v1549 = vpack.c.bf16 %v1525, %v1522
    %v1550 = vpack.c.bf16 %v1526, %v1523
    %v1551 = vld [vmem:[%s5] sm:$0xf]
    %v1552 = vld [vmem:[%s5 + $0x4] sm:$0xf]
    %v1553 = vld [vmem:[%s5 + $0x8] sm:$0xf]
    %v1554 = vld [vmem:[%s5 + $0xc] sm:$0xf]
    %v1555 = vld [vmem:[%s5 + $0x10] sm:$0xf]
    %v1556 = vld [vmem:[%s5 + $0x14] sm:$0xf]
    %v1557 = vld [vmem:[%s5 + $0x18] sm:$0xf]
    %v1558 = vld [vmem:[%s5 + $0x1c] sm:$0xf]
    %v1559 = vld [vmem:[%s5 + $0x20] sm:$0xf]
    %v1560 = vld [vmem:[%s5 + $0x24] sm:$0xf]
    %v1561 = vld [vmem:[%s5 + $0x28] sm:$0xf]
    %v1562 = vld [vmem:[%s5 + $0x2c] sm:$0xf]
    %v1563 = vld [vmem:[%s5 + $0x30] sm:$0xf]
    %v1564 = vld [vmem:[%s5 + $0x34] sm:$0xf]
    %v1565 = vld [vmem:[%s5 + $0x38] sm:$0xf]
    %v1566 = vld [vmem:[%s5 + $0x3c] sm:$0xf]
    %v1567 = vld [vmem:[%s5 + $0x40] sm:$0xf]
    %v1568 = vld [vmem:[%s5 + $0x44] sm:$0xf]
    %v1569 = vld [vmem:[%s5 + $0x48] sm:$0xf]
    %v1570 = vld [vmem:[%s5 + $0x4c] sm:$0xf]
    %v1571 = vld [vmem:[%s5 + $0x50] sm:$0xf]
    %v1572 = vld [vmem:[%s5 + $0x54] sm:$0xf]
    %v1573 = vld [vmem:[%s5 + $0x58] sm:$0xf]
    %v1574 = vld [vmem:[%s5 + $0x5c] sm:$0xf]
    %v1575 = vld [vmem:[%s5 + $0x60] sm:$0xf]
    %v1576 = vld [vmem:[%s5 + $0x64] sm:$0xf]
    %v1577 = vld [vmem:[%s5 + $0x68] sm:$0xf]
    %v1578 = vld [vmem:[%s5 + $0x6c] sm:$0xf]
    %v1579 = vld [vmem:[%s5 + $0x70] sm:$0xf]
    %v1580 = vld [vmem:[%s5 + $0x74] sm:$0xf]
    %v1581 = vld [vmem:[%s5 + $0x78] sm:$0xf]
    %v1582 = vld [vmem:[%s5 + $0x7c] sm:$0xf]
    %v1583 = vld [vmem:[%s5 + $0x80] sm:$0xf]
    %v1584 = vld [vmem:[%s5 + $0x84] sm:$0xf]
    %v1585 = vld [vmem:[%s5 + $0x88] sm:$0xf]
    %v1586 = vld [vmem:[%s5 + $0x8c] sm:$0xf]
    %v1587 = vld [vmem:[%s5 + $0x90] sm:$0xf]
    %v1588 = vld [vmem:[%s5 + $0x94] sm:$0x3]
    %v1589 = vld [vmem:[#allocation2] sm:$0x1]
    %v1591 = vlaneseq
    %v1592 = vshrl.u32 %v1591, 7
    %v1593 = vsub.s32 0, %v1592
    %v1594 = vrot.slane %v1589, %v1593
    %v1634 = vunpack.c.l.b16 %v1551
    %v1635 = vunpack.c.l.b16 %v1552
    %v1636 = vunpack.c.l.b16 %v1553
    %v1637 = vunpack.c.l.b16 %v1554
    %v1638 = vunpack.c.l.b16 %v1555
    %v1639 = vunpack.c.l.b16 %v1556
    %v1640 = vunpack.c.l.b16 %v1557
    %v1641 = vunpack.c.l.b16 %v1558
    %v1642 = vunpack.c.l.b16 %v1559
    %v1643 = vunpack.c.l.b16 %v1560
    %v1644 = vunpack.c.l.b16 %v1561
    %v1645 = vunpack.c.l.b16 %v1562
    %v1646 = vunpack.c.l.b16 %v1563
    %v1647 = vunpack.c.l.b16 %v1564
    %v1648 = vunpack.c.l.b16 %v1565
    %v1649 = vunpack.c.l.b16 %v1566
    %v1650 = vunpack.c.l.b16 %v1567
    %v1651 = vunpack.c.l.b16 %v1568
    %v1652 = vunpack.c.l.b16 %v1569
    %v1653 = vunpack.c.l.b16 %v1570
    %v1654 = vunpack.c.l.b16 %v1571
    %v1655 = vunpack.c.l.b16 %v1572
    %v1656 = vunpack.c.l.b16 %v1573
    %v1657 = vunpack.c.l.b16 %v1574
    %v1658 = vunpack.c.l.b16 %v1575
    %v1659 = vunpack.c.l.b16 %v1576
    %v1660 = vunpack.c.l.b16 %v1577
    %v1661 = vunpack.c.l.b16 %v1578
    %v1662 = vunpack.c.l.b16 %v1579
    %v1663 = vunpack.c.l.b16 %v1580
    %v1664 = vunpack.c.l.b16 %v1581
    %v1665 = vunpack.c.l.b16 %v1582
    %v1666 = vunpack.c.l.b16 %v1583
    %v1667 = vunpack.c.l.b16 %v1584
    %v1668 = vunpack.c.l.b16 %v1585
    %v1669 = vunpack.c.l.b16 %v1586
    %v1670 = vunpack.c.l.b16 %v1587
    %v1671 = vunpack.c.l.b16 %v1588
    %v1672 = vpack.c.b16 %v1635, %v1634
    %v1673 = vpack.c.b16 %v1637, %v1636
    %v1674 = vpack.c.b16 %v1639, %v1638
    %v1675 = vpack.c.b16 %v1641, %v1640
    %v1676 = vpack.c.b16 %v1643, %v1642
    %v1677 = vpack.c.b16 %v1645, %v1644
    %v1678 = vpack.c.b16 %v1647, %v1646
    %v1679 = vpack.c.b16 %v1649, %v1648
    %v1680 = vpack.c.b16 %v1651, %v1650
    %v1681 = vpack.c.b16 %v1653, %v1652
    %v1682 = vpack.c.b16 %v1655, %v1654
    %v1683 = vpack.c.b16 %v1657, %v1656
    %v1684 = vpack.c.b16 %v1659, %v1658
    %v1685 = vpack.c.b16 %v1661, %v1660
    %v1686 = vpack.c.b16 %v1663, %v1662
    %v1687 = vpack.c.b16 %v1665, %v1664
    %v1688 = vpack.c.b16 %v1667, %v1666
    %v1689 = vpack.c.b16 %v1669, %v1668
    %v1690 = vpack.c.b16 %v1671, %v1670
    %vm1709 = vcmask 359424
    %v1711 = vsel %vm1709, %v1529, 0
    %v1714 = vsel %vm1709, %v1532, 0
    %v1717 = vsel %vm1709, %v1535, 0
    %v1720 = vsel %vm1709, %v1538, 0
    %v1723 = vsel %vm1709, %v1541, 0
    %v1726 = vsel %vm1709, %v1544, 0
    %v1729 = vsel %vm1709, %v1547, 0
    %v1732 = vsel %vm1709, %v1550, 0
    %vm1734 = vcmask 1045504
    %v1736 = vsel %vm1734, %v1690, 0
    %1738 = vmatprep.subr.bf16.mxu0 0
    %1739 = vmatpush1.bf16.msra.mxu0 %v1672
    %1740 = vmatprep.subr.bf16.mxu0 0
    %1741 = vmatpush1.bf16.msra.mxu0 %v1673
    %1742 = vmatprep.subr.bf16.mxu0 0
    %1743 = vmatpush1.bf16.msra.mxu0 %v1674
    %1744 = vmatprep.subr.bf16.mxu0 0
    %1745 = vmatpush1.bf16.msra.mxu0 %v1675
    %1746 = vmatprep.subr.bf16.mxu0 0
    %1747 = vmatpush1.bf16.msra.mxu0 %v1676
    %1748 = vmatprep.subr.bf16.mxu0 0
    %1749 = vmatpush1.bf16.msra.mxu0 %v1677
    %1750 = vmatprep.subr.bf16.mxu0 0
    %1751 = vmatpush1.bf16.msra.mxu0 %v1678
    %1752 = vmatprep.subr.bf16.mxu0 0
    %1753 = vmatpush1.bf16.msra.mxu0 %v1679
    %1754 = vmatprep.subr.bf16.mxu0 0
    %1755 = vmatpush1.bf16.msra.mxu0 %v1680
    %1756 = vmatprep.subr.bf16.mxu0 0
    %1757 = vmatpush1.bf16.msra.mxu0 %v1681
    %1758 = vmatprep.subr.bf16.mxu0 0
    %1759 = vmatpush1.bf16.msra.mxu0 %v1682
    %1760 = vmatprep.subr.bf16.mxu0 0
    %1761 = vmatpush1.bf16.msra.mxu0 %v1683
    %1762 = vmatprep.subr.bf16.mxu0 0
    %1763 = vmatpush1.bf16.msra.mxu0 %v1684
    %1764 = vmatprep.subr.bf16.mxu0 0
    %1765 = vmatpush1.bf16.msra.mxu0 %v1685
    %1766 = vmatprep.subr.bf16.mxu0 0
    %1767 = vmatpush1.bf16.msra.mxu0 %v1686
    %1768 = vmatprep.subr.bf16.mxu0 0
    %1769 = vmatpush1.bf16.msra.mxu0 %v1687
    %1770 = vmatprep.mubr.bf16.mxu0 %v1528
    %1771 = vmatmul.mubr.bf16.gmra.mrb[0].mxu0 %v1527
    %v1772 = vpop.f32.mrb[0].mxu0
    %v1773 = vadd.f32 %v1594, %v1772
    %v1774 = vpop.f32.mrb[0].mxu0
    %v1775 = vpop.f32.mrb[0].mxu0
    %v1776 = vadd.f32 %v1594, %v1775
    %v1777 = vpop.f32.mrb[0].mxu0
    %1778 = vmatprep.mubr.bf16.mxu0 %v1531
    %1779 = vmatmul.mubr.bf16.gmra.mrb[0].mxu0 %v1530
    %v1780 = vpop.f32.mrb[0].mxu0
    %v1781 = vadd.f32 %v1594, %v1780
    %v1782 = vpop.f32.mrb[0].mxu0
    %v1783 = vpop.f32.mrb[0].mxu0
    %v1784 = vadd.f32 %v1594, %v1783
    %v1785 = vpop.f32.mrb[0].mxu0
    %1786 = vmatprep.mubr.bf16.mxu0 %v1534
    %1787 = vmatmul.mubr.bf16.gmra.mrb[0].mxu0 %v1533
    %v1788 = vpop.f32.mrb[0].mxu0
    %v1789 = vadd.f32 %v1594, %v1788
    %v1790 = vpop.f32.mrb[0].mxu0
    %v1791 = vpop.f32.mrb[0].mxu0
    %v1792 = vadd.f32 %v1594, %v1791
    %v1793 = vpop.f32.mrb[0].mxu0
    %1794 = vmatprep.mubr.bf16.mxu0 %v1537
    %1795 = vmatmul.mubr.bf16.gmra.mrb[0].mxu0 %v1536
    %v1796 = vpop.f32.mrb[0].mxu0
    %v1797 = vadd.f32 %v1594, %v1796
    %v1798 = vpop.f32.mrb[0].mxu0
    %v1799 = vpop.f32.mrb[0].mxu0
    %v1800 = vadd.f32 %v1594, %v1799
    %v1801 = vpop.f32.mrb[0].mxu0
    %1802 = vmatprep.mubr.bf16.mxu0 %v1540
    %1803 = vmatmul.mubr.bf16.gmra.mrb[0].mxu0 %v1539
    %v1804 = vpop.f32.mrb[0].mxu0
    %v1805 = vadd.f32 %v1594, %v1804
    %v1806 = vpop.f32.mrb[0].mxu0
    %v1807 = vpop.f32.mrb[0].mxu0
    %v1808 = vadd.f32 %v1594, %v1807
    %v1809 = vpop.f32.mrb[0].mxu0
    %1810 = vmatprep.mubr.bf16.mxu0 %v1543
    %1811 = vmatmul.mubr.bf16.gmra.mrb[0].mxu0 %v1542
    %v1812 = vpop.f32.mrb[0].mxu0
    %v1813 = vadd.f32 %v1594, %v1812
    %v1814 = vpop.f32.mrb[0].mxu0
    %v1815 = vpop.f32.mrb[0].mxu0
    %v1816 = vadd.f32 %v1594, %v1815
    %v1817 = vpop.f32.mrb[0].mxu0
    %1818 = vmatprep.mubr.bf16.mxu0 %v1546
    %1819 = vmatmul.mubr.bf16.gmra.mrb[0].mxu0 %v1545
    %v1820 = vpop.f32.mrb[0].mxu0
    %v1821 = vadd.f32 %v1594, %v1820
    %v1822 = vpop.f32.mrb[0].mxu0
    %v1823 = vpop.f32.mrb[0].mxu0
    %v1824 = vadd.f32 %v1594, %v1823
    %v1825 = vpop.f32.mrb[0].mxu0
    %1826 = vmatprep.mubr.bf16.mxu0 %v1549
    %1827 = vmatmul.mubr.bf16.gmra.mrb[0].mxu0 %v1548
    %v1828 = vpop.f32.mrb[0].mxu0
    %v1829 = vadd.f32 %v1594, %v1828
    %v1830 = vpop.f32.mrb[0].mxu0
    %v1831 = vpop.f32.mrb[0].mxu0
    %v1832 = vadd.f32 %v1594, %v1831
    %v1833 = vpop.f32.mrb[0].mxu0
    %1834 = vdwg.mxu0
    %1835 = vmatprep.subr.bf16.mxu0 0
    %1836 = vmatpush1.bf16.msra.mxu0 %v1688
    %1837 = vmatprep.subr.bf16.mxu0 0
    %1838 = vmatpush1.bf16.msra.mxu0 %v1689
    %1839 = vmatprep.subr.bf16.mxu0 0
    %1840 = vmatpush1.bf16.msra.mxu0 %v1736
    %1841 = vmatprep.subr.bf16.mxu0 0
    %1842 = vmatpush1.bf16.msra.mxu0 0
    %1843 = vmatprep.subr.bf16.mxu0 0
    %1844 = vmatpush1.bf16.msra.mxu0 0
    %1845 = vmatprep.subr.bf16.mxu0 0
    %1846 = vmatpush1.bf16.msra.mxu0 0
    %1847 = vmatprep.subr.bf16.mxu0 0
    %1848 = vmatpush1.bf16.msra.mxu0 0
    %1849 = vmatprep.subr.bf16.mxu0 0
    %1850 = vmatpush1.bf16.msra.mxu0 0
    %1851 = vmatprep.subr.bf16.mxu0 0
    %1852 = vmatpush1.bf16.msra.mxu0 0
    %1853 = vmatprep.subr.bf16.mxu0 0
    %1854 = vmatpush1.bf16.msra.mxu0 0
    %1855 = vmatprep.subr.bf16.mxu0 0
    %1856 = vmatpush1.bf16.msra.mxu0 0
    %1857 = vmatprep.subr.bf16.mxu0 0
    %1858 = vmatpush1.bf16.msra.mxu0 0
    %1859 = vmatprep.subr.bf16.mxu0 0
    %1860 = vmatpush1.bf16.msra.mxu0 0
    %1861 = vmatprep.subr.bf16.mxu0 0
    %1862 = vmatpush1.bf16.msra.mxu0 0
    %1863 = vmatprep.subr.bf16.mxu0 0
    %1864 = vmatpush1.bf16.msra.mxu0 0
    %1865 = vmatprep.subr.bf16.mxu0 0
    %1866 = vmatpush1.bf16.msra.mxu0 0
    %1867 = vmatprep.mubr.bf16.mxu0 0
    %1868 = vmatmul.mubr.bf16.gmra.mrb[0].mxu0 %v1711
    %v1869 = vpop.f32.mrb[0].mxu0
    %v1870 = vadd.f32 %v1773, %v1869
    %v1871 = vpop.f32.mrb[0].mxu0
    %v1872 = vpop.f32.mrb[0].mxu0
    %v1873 = vadd.f32 %v1776, %v1872
    %v1874 = vpop.f32.mrb[0].mxu0
    %1875 = vmatprep.mubr.bf16.mxu0 0
    %1876 = vmatmul.mubr.bf16.gmra.mrb[0].mxu0 %v1714
    %v1877 = vpop.f32.mrb[0].mxu0
    %v1878 = vadd.f32 %v1781, %v1877
    %v1879 = vpop.f32.mrb[0].mxu0
    %v1880 = vpop.f32.mrb[0].mxu0
    %v1881 = vadd.f32 %v1784, %v1880
    %v1882 = vpop.f32.mrb[0].mxu0
    %1883 = vmatprep.mubr.bf16.mxu0 0
    %1884 = vmatmul.mubr.bf16.gmra.mrb[0].mxu0 %v1717
    %v1885 = vpop.f32.mrb[0].mxu0
    %v1886 = vadd.f32 %v1789, %v1885
    %v1887 = vpop.f32.mrb[0].mxu0
    %v1888 = vpop.f32.mrb[0].mxu0
    %v1889 = vadd.f32 %v1792, %v1888
    %v1890 = vpop.f32.mrb[0].mxu0
    %1891 = vmatprep.mubr.bf16.mxu0 0
    %1892 = vmatmul.mubr.bf16.gmra.mrb[0].mxu0 %v1720
    %v1893 = vpop.f32.mrb[0].mxu0
    %v1894 = vadd.f32 %v1797, %v1893
    %v1895 = vpop.f32.mrb[0].mxu0
    %v1896 = vpop.f32.mrb[0].mxu0
    %v1897 = vadd.f32 %v1800, %v1896
    %v1898 = vpop.f32.mrb[0].mxu0
    %1899 = vmatprep.mubr.bf16.mxu0 0
    %1900 = vmatmul.mubr.bf16.gmra.mrb[0].mxu0 %v1723
    %v1901 = vpop.f32.mrb[0].mxu0
    %v1902 = vadd.f32 %v1805, %v1901
    %v1903 = vpop.f32.mrb[0].mxu0
    %v1904 = vpop.f32.mrb[0].mxu0
    %v1905 = vadd.f32 %v1808, %v1904
    %v1906 = vpop.f32.mrb[0].mxu0
    %1907 = vmatprep.mubr.bf16.mxu0 0
    %1908 = vmatmul.mubr.bf16.gmra.mrb[0].mxu0 %v1726
    %v1909 = vpop.f32.mrb[0].mxu0
    %v1910 = vadd.f32 %v1813, %v1909
    %v1911 = vpop.f32.mrb[0].mxu0
    %v1912 = vpop.f32.mrb[0].mxu0
    %v1913 = vadd.f32 %v1816, %v1912
    %v1914 = vpop.f32.mrb[0].mxu0
    %1915 = vmatprep.mubr.bf16.mxu0 0
    %1916 = vmatmul.mubr.bf16.gmra.mrb[0].mxu0 %v1729
    %v1917 = vpop.f32.mrb[0].mxu0
    %v1918 = vadd.f32 %v1821, %v1917
    %v1919 = vpop.f32.mrb[0].mxu0
    %v1920 = vpop.f32.mrb[0].mxu0
    %v1921 = vadd.f32 %v1824, %v1920
    %v1922 = vpop.f32.mrb[0].mxu0
    %1923 = vmatprep.mubr.bf16.mxu0 0
    %1924 = vmatmul.mubr.bf16.gmra.mrb[0].mxu0 %v1732
    %v1925 = vpop.f32.mrb[0].mxu0
    %v1926 = vadd.f32 %v1829, %v1925
    %v1927 = vpop.f32.mrb[0].mxu0
    %v1928 = vpop.f32.mrb[0].mxu0
    %v1929 = vadd.f32 %v1832, %v1928
    %v1930 = vpop.f32.mrb[0].mxu0
    %1931 = vdwg.mxu0
    %vm1932 = vcmask 7168
    %1933 = vst.msk [vmem:[%s7] sm:$0xff] %vm1932, %v1870
    %1934 = vst.msk [vmem:[%s7 + $0x8] sm:$0xff] %vm1932, %v1873
    %1935 = vst.msk [vmem:[%s7 + $0x10] sm:$0xff] %vm1932, %v1878
    %1936 = vst.msk [vmem:[%s7 + $0x18] sm:$0xff] %vm1932, %v1881
    %1937 = vst.msk [vmem:[%s7 + $0x20] sm:$0xff] %vm1932, %v1886
    %1938 = vst.msk [vmem:[%s7 + $0x28] sm:$0xff] %vm1932, %v1889
    %1939 = vst.msk [vmem:[%s7 + $0x30] sm:$0xff] %vm1932, %v1894
    %1940 = vst.msk [vmem:[%s7 + $0x38] sm:$0xff] %vm1932, %v1897
    %1941 = vst.msk [vmem:[%s7 + $0x40] sm:$0xff] %vm1932, %v1902
    %1942 = vst.msk [vmem:[%s7 + $0x48] sm:$0xff] %vm1932, %v1905
    %1943 = vst.msk [vmem:[%s7 + $0x50] sm:$0xff] %vm1932, %v1910
    %1944 = vst.msk [vmem:[%s7 + $0x58] sm:$0xff] %vm1932, %v1913
    %1945 = vst.msk [vmem:[%s7 + $0x60] sm:$0xff] %vm1932, %v1918
    %1946 = vst.msk [vmem:[%s7 + $0x68] sm:$0xff] %vm1932, %v1921
    %1947 = vst.msk [vmem:[%s7 + $0x70] sm:$0xff] %vm1932, %v1926
    %1948 = vst.msk [vmem:[%s7 + $0x78] sm:$0xff] %vm1932, %v1929
    // Predicated region
    $region34: #{critic_forward.1} parent=1 // pred_check
      _
    $region35: #{critic_forward.1} parent=1 // pred_check_branch
      %1950 = sbr.rel (0) target = $region37
    $region36: #{critic_forward.1} parent=1 // pred_region
      _
    $region37: #{critic_forward.1} parent=1 // pred_fallthru
      _
    // Predicated region
    $region38: #{critic_forward.1} parent=1 // pred_check
      _
    $region39: #{critic_forward.1} parent=1 // pred_check_branch
      %1952 = sbr.rel (0) target = $region41
    $region40: #{critic_forward.1} parent=1 // pred_region
      _
    $region41: #{critic_forward.1} parent=1 // pred_fallthru
      _
    %1953 = vsyncpa [#allocation4], 1

</llo_original>
